<compile_context>
chip_gen: v7x
topology: tpu7x:2x2x1
jax: 0.10.0
libtpu: 0.0.40
codegen_flags: <defaults>
</compile_context>

<pallas_src>
import math

import jax
import jax.numpy as jnp
from jax import lax
from jax.experimental import pallas as pl
from jax.experimental.pallas import tpu as pltpu

# ----------------------------- configuration --------------------------------
OUT_FEATURE = 8
MIN_DEG = 0
MAX_DEG = 1
LAYER_NUM = 4
HIDDEN = 32
SKIPS = (2,)

POINT_DIM = 3
NUM_DEG = MAX_DEG - MIN_DEG
POSENC_DIM = POINT_DIM * 2 * NUM_DEG          # 6
EMBED_DIM = 4
IN_FEATURE = POSENC_DIM + EMBED_DIM           # 10 (matches module's in_feature)

# packed feature-major input: rows = [points (3) | embed (4) | zero pad (1)]
PACK_ROWS = 8
PTS_OFF = 0
EMB_OFF = POINT_DIM

# packed in-kernel feature tile: per band -> [mixed sin/embed (8) | cos (8)]
FEAT_ROWS = 2 * PACK_ROWS * NUM_DEG           # 16


def _round_up(x, m):
    return ((x + m - 1) // m) * m


# ------------------------------- kernel --------------------------------------
def hypersheet_kernel(pe_ref, *rest):
    """rest = (flat packed weights..., out_ref). Feature-major tiles are (rows, TM)."""
    out_ref = rest[-1]
    w_iter = iter(rest[:-1])

    def next_w():
        return next(w_iter)[...]

    pe = pe_ref[...].astype(jnp.float32)                  # (PACK_ROWS, TM)
    row = lax.broadcasted_iota(jnp.int32, pe.shape, 0)    # sublane index

    # Build ONE packed feature tile:  rows per band b:
    #   [sin(2^d * points) (3) | embed (4, band 0 only) | 0]  then  [cos(2^d * pe) (8)]
    # Garbage rows (sin/cos of embed, pad) are neutralized by zero weight columns.
    bands = []
    for d in range(MIN_DEG, MAX_DEG):
        scaled = pe * (2.0 ** d)
        s = jnp.sin(scaled)
        if d == MIN_DEG:
            s = jnp.where(row < POINT_DIM, s, pe)          # stash raw embed rows in band 0
        bands.append(s)
        bands.append(jnp.cos(scaled))                      # == sin(x + pi/2)
    feat = jnp.concatenate(bands, axis=0) if len(bands) > 1 else bands[0]  # (FEAT_ROWS, TM)

    x = None
    for i in range(LAYER_NUM):
        if i == 0:
            # concat([posenc(points), embed]) @ W  ->  single dot against packed feat
            h = jnp.dot(next_w(), feat, preferred_element_type=jnp.float32)
        elif i in SKIPS:
            # concat([x, inputs]) @ W  ->  W_x @ x + W_feat @ feat
            h = (jnp.dot(next_w(), x, preferred_element_type=jnp.float32)
                 + jnp.dot(next_w(), feat, preferred_element_type=jnp.float32))
        else:
            h = jnp.dot(next_w(), x, preferred_element_type=jnp.float32)
        b = next_w()                                       # (HIDDEN, 1) -> broadcast over lanes
        x = jnp.maximum(h + b, 0.0)                        # ReLU

    w_out = next_w()
    b_out = next_w()
    y = jnp.dot(w_out, x, preferred_element_type=jnp.float32) + b_out
    out_ref[...] = y.astype(out_ref.dtype)                 # dense lane stores (OUT_FEATURE, TM)


# --------------------- wrapper-side weight transpose / split ------------------
def _feat_weight(wt, off):
    """Re-arrange the posenc+embed columns of a transposed weight `wt[:, off:off+IN_FEATURE]`
    into the packed (rows, FEAT_ROWS) layout used by the in-kernel feat tile."""
    rows = wt.shape[0]
    wf = jnp.zeros((rows, FEAT_ROWS), jnp.float32)
    for b in range(NUM_DEG):
        sin_src = off + 2 * POINT_DIM * b
        cos_src = sin_src + POINT_DIM
        sin_dst = 2 * PACK_ROWS * b + PTS_OFF
        cos_dst = 2 * PACK_ROWS * b + PACK_ROWS + PTS_OFF
        wf = wf.at[:, sin_dst:sin_dst + POINT_DIM].set(wt[:, sin_src:sin_src + POINT_DIM])
        wf = wf.at[:, cos_dst:cos_dst + POINT_DIM].set(wt[:, cos_src:cos_src + POINT_DIM])
    emb_src = off + POSENC_DIM
    wf = wf.at[:, EMB_OFF:EMB_OFF + EMBED_DIM].set(wt[:, emb_src:emb_src + EMBED_DIM])
    return wf


def pack_params(params):
    """params: list of (w[din,dout], b[1,dout]).  Returns flat list of kernel operands."""
    flat = []
    for i in range(LAYER_NUM):
        w, b = params[i]
        wt = jnp.asarray(w, jnp.float32).T                 # (HIDDEN, din)
        bt = jnp.asarray(b, jnp.float32).T                 # (HIDDEN, 1)
        if i == 0:
            flat.append(_feat_weight(wt, 0))               # (HIDDEN, FEAT_ROWS)
        elif i in SKIPS:
            flat.append(wt[:, :HIDDEN])                    # x-part of the skip concat
            flat.append(_feat_weight(wt, HIDDEN))          # input-part of the skip concat
        else:
            flat.append(wt)
        flat.append(bt)
    w, b = params[-1]
    flat.append(jnp.asarray(w, jnp.float32).T)             # (OUT_FEATURE, HIDDEN)
    flat.append(jnp.asarray(b, jnp.float32).T)             # (OUT_FEATURE, 1)
    return flat


# ------------------------------- wrapper --------------------------------------
def hypersheet_mlp(points, embed, params, *, tm=2048):
    """points: (N, 3) f32, embed: (N, E) f32 -> (N, OUT_FEATURE) f32."""
    n = points.shape[0]
    flat_w = pack_params(params)

    # One packed feature-major HBM operand per grid step (single input DMA stream).
    pe = jnp.concatenate(
        [jnp.asarray(points, jnp.float32).T,
         jnp.asarray(embed, jnp.float32).T,
         jnp.zeros((PACK_ROWS - POINT_DIM - EMBED_DIM, n), jnp.float32)],
        axis=0)                                            # (PACK_ROWS, N)

    # Big lane-dense tile (multiple of 256 for the 256-wide MXU on v6e/v7x);
    # pad N with zeros instead of asserting divisibility, slice the tail off after.
    tm = _round_up(min(tm, _round_up(n, 256)), 256)
    n_pad = _round_up(n, tm)
    if n_pad != n:
        pe = jnp.pad(pe, ((0, 0), (0, n_pad - n)))
    grid = (n_pad // tm,)

    in_specs = [pl.BlockSpec((PACK_ROWS, tm), lambda i: (0, i))]
    for w in flat_w:
        in_specs.append(pl.BlockSpec(w.shape, lambda i: (0, 0)))   # small, fully resident
    out_specs = pl.BlockSpec((OUT_FEATURE, tm), lambda i: (0, i))

    out_t = pl.pallas_call(
        hypersheet_kernel,
        out_shape=jax.ShapeDtypeStruct((OUT_FEATURE, n_pad), jnp.float32),
        grid=grid,
        in_specs=in_specs,
        out_specs=out_specs,
        compiler_params=pltpu.CompilerParams(dimension_semantics=("parallel",)),
    )(pe, *flat_w)

    return out_t[:, :n].T                                  # back to (N, OUT_FEATURE)


# ------------------------ deterministic parameter init ------------------------
def init_params(key):
    dims_in = []
    for i in range(LAYER_NUM):
        if i == 0:
            dims_in.append(IN_FEATURE)
        elif i in SKIPS:
            dims_in.append(HIDDEN + IN_FEATURE)
        else:
            dims_in.append(HIDDEN)
    layer_dims = [(d, HIDDEN) for d in dims_in] + [(HIDDEN, OUT_FEATURE)]

    params = []
    for (din, dout) in layer_dims:
        key, kw, kb = jax.random.split(key, 3)
        scale = 1.0 / math.sqrt(din)
        w = jax.random.uniform(kw, (din, dout), jnp.float32, -scale, scale)
        b = jax.random.uniform(kb, (1, dout), jnp.float32, -scale, scale)
        params.append((w, b))
    return params


# ------------------------------ pure-JAX reference ----------------------------
def reference_forward(points, embed, params):
    feats = []
    for d in range(MIN_DEG, MAX_DEG):
        scaled = points * (2.0 ** d)
        feats.append(jnp.sin(scaled))
        feats.append(jnp.cos(scaled))
    inputs = jnp.concatenate(feats + [embed], axis=-1)
    x = inputs
    for i in range(LAYER_NUM):
        w, b = params[i]
        if i in SKIPS:
            x = jnp.concatenate([x, inputs], axis=-1)
        x = jnp.maximum(jnp.dot(x, w, precision=jax.lax.Precision.HIGHEST) + b, 0.0)
    w, b = params[-1]
    return jnp.dot(x, w, precision=jax.lax.Precision.HIGHEST) + b


# ----------------------------------- main --------------------------------------
if __name__ == "__main__":
    key = jax.random.PRNGKey(0)
    k_pts, k_emb, k_par = jax.random.split(key, 3)

    N = 300  # deliberately not a multiple of the tile: exercises the padded-tail path
    points = jax.random.normal(k_pts, (N, POINT_DIM), jnp.float32)
    embed = jax.random.normal(k_emb, (N, EMBED_DIM), jnp.float32)
    params = init_params(k_par)

    out = hypersheet_mlp(points, embed, params)
    out = jax.block_until_ready(out)

    ref = reference_forward(points, embed, params)
    assert out.shape == (N, OUT_FEATURE)
    assert jnp.allclose(out, ref, rtol=1e-5, atol=1e-5), "mismatch vs JAX reference"

    print("KERNEL_OK")
</pallas_src>

<mosaic_0001>
module attributes {stable_mosaic.version = 11 : i64} {
  func.func @hypersheet_kernel(%arg0: i32, %arg1: memref<8x512xf32, #tpu.memory_space<vmem>>, %arg2: memref<32x16xf32, #tpu.memory_space<vmem>>, %arg3: memref<32x1xf32, #tpu.memory_space<vmem>>, %arg4: memref<32x32xf32, #tpu.memory_space<vmem>>, %arg5: memref<32x1xf32, #tpu.memory_space<vmem>>, %arg6: memref<32x32xf32, #tpu.memory_space<vmem>>, %arg7: memref<32x16xf32, #tpu.memory_space<vmem>>, %arg8: memref<32x1xf32, #tpu.memory_space<vmem>>, %arg9: memref<32x32xf32, #tpu.memory_space<vmem>>, %arg10: memref<32x1xf32, #tpu.memory_space<vmem>>, %arg11: memref<8x32xf32, #tpu.memory_space<vmem>>, %arg12: memref<8x1xf32, #tpu.memory_space<vmem>>, %arg13: memref<8x512xf32, #tpu.memory_space<vmem>>) attributes {dimension_semantics = [#tpu.dimension_semantics<parallel>], iteration_bounds = array<i64: 1>, scalar_prefetch = 0 : i64, scratch_operands = 0 : i64, tpu.core_type = #tpu.core_type<tc>, window_params = [{transform_indices = @transform_0, window_bounds = array<i64: 8, 512>}, {pipeline_mode = #tpu.pipeline_mode<synchronous>, transform_indices = @transform_1, window_bounds = array<i64: 32, 16>}, {pipeline_mode = #tpu.pipeline_mode<synchronous>, transform_indices = @transform_2, window_bounds = array<i64: 32, 1>}, {pipeline_mode = #tpu.pipeline_mode<synchronous>, transform_indices = @transform_3, window_bounds = array<i64: 32, 32>}, {pipeline_mode = #tpu.pipeline_mode<synchronous>, transform_indices = @transform_4, window_bounds = array<i64: 32, 1>}, {pipeline_mode = #tpu.pipeline_mode<synchronous>, transform_indices = @transform_5, window_bounds = array<i64: 32, 32>}, {pipeline_mode = #tpu.pipeline_mode<synchronous>, transform_indices = @transform_6, window_bounds = array<i64: 32, 16>}, {pipeline_mode = #tpu.pipeline_mode<synchronous>, transform_indices = @transform_7, window_bounds = array<i64: 32, 1>}, {pipeline_mode = #tpu.pipeline_mode<synchronous>, transform_indices = @transform_8, window_bounds = array<i64: 32, 32>}, {pipeline_mode = #tpu.pipeline_mode<synchronous>, transform_indices = @transform_9, window_bounds = array<i64: 32, 1>}, {pipeline_mode = #tpu.pipeline_mode<synchronous>, transform_indices = @transform_10, window_bounds = array<i64: 8, 32>}, {pipeline_mode = #tpu.pipeline_mode<synchronous>, transform_indices = @transform_11, window_bounds = array<i64: 8, 1>}, {transform_indices = @transform_12, window_bounds = array<i64: 8, 512>}]} {
    %c0 = arith.constant 0 : index
    %c0_0 = arith.constant 0 : index
    %0 = vector.load %arg1[%c0, %c0_0] : memref<8x512xf32, #tpu.memory_space<vmem>>, vector<8x512xf32>
    %1 = tpu.iota {dimensions = array<i32: 0>} : vector<8x512xi32>
    %cst = arith.constant 1.000000e+00 : f32
    %2 = vector.broadcast %cst : f32 to vector<8x512xf32>
    %3 = arith.mulf %0, %2 : vector<8x512xf32>
    %4 = math.sin %3 : vector<8x512xf32>
    %c3_i32 = arith.constant 3 : i32
    %5 = vector.broadcast %c3_i32 : i32 to vector<8x512xi32>
    %6 = arith.cmpi slt, %1, %5 : vector<8x512xi32>
    %7 = arith.select %6, %4, %0 : vector<8x512xi1>, vector<8x512xf32>
    %8 = math.cos %3 : vector<8x512xf32>
    %9 = tpu.concatenate %7, %8 in 0 : vector<8x512xf32>, vector<8x512xf32> -> vector<16x512xf32>
    %c0_1 = arith.constant 0 : index
    %c0_2 = arith.constant 0 : index
    %10 = vector.load %arg2[%c0_1, %c0_2] : memref<32x16xf32, #tpu.memory_space<vmem>>, vector<32x16xf32>
    %cst_3 = arith.constant dense<0.000000e+00> : vector<32x512xf32>
    %11 = tpu.matmul %10, %9, %cst_3 {dimension_numbers = #tpu.dot_dimension_numbers<[1], [0], [0], [1], [0, 0, 1, 1], [], []>} : vector<32x16xf32>, vector<16x512xf32>, vector<32x512xf32> -> vector<32x512xf32>
    %c0_4 = arith.constant 0 : index
    %c0_5 = arith.constant 0 : index
    %12 = vector.load %arg3[%c0_4, %c0_5] : memref<32x1xf32, #tpu.memory_space<vmem>>, vector<32x1xf32>
    %13 = vector.broadcast %12 : vector<32x1xf32> to vector<32x512xf32>
    %14 = arith.addf %11, %13 : vector<32x512xf32>
    %cst_6 = arith.constant 0.000000e+00 : f32
    %15 = vector.broadcast %cst_6 : f32 to vector<32x512xf32>
    %16 = arith.maximumf %14, %15 : vector<32x512xf32>
    %c0_7 = arith.constant 0 : index
    %c0_8 = arith.constant 0 : index
    %17 = vector.load %arg4[%c0_7, %c0_8] : memref<32x32xf32, #tpu.memory_space<vmem>>, vector<32x32xf32>
    %cst_9 = arith.constant dense<0.000000e+00> : vector<32x512xf32>
    %18 = tpu.matmul %17, %16, %cst_9 {dimension_numbers = #tpu.dot_dimension_numbers<[1], [0], [0], [1], [0, 0, 1, 1], [], []>} : vector<32x32xf32>, vector<32x512xf32>, vector<32x512xf32> -> vector<32x512xf32>
    %c0_10 = arith.constant 0 : index
    %c0_11 = arith.constant 0 : index
    %19 = vector.load %arg5[%c0_10, %c0_11] : memref<32x1xf32, #tpu.memory_space<vmem>>, vector<32x1xf32>
    %20 = vector.broadcast %19 : vector<32x1xf32> to vector<32x512xf32>
    %21 = arith.addf %18, %20 : vector<32x512xf32>
    %cst_12 = arith.constant 0.000000e+00 : f32
    %22 = vector.broadcast %cst_12 : f32 to vector<32x512xf32>
    %23 = arith.maximumf %21, %22 : vector<32x512xf32>
    %c0_13 = arith.constant 0 : index
    %c0_14 = arith.constant 0 : index
    %24 = vector.load %arg6[%c0_13, %c0_14] : memref<32x32xf32, #tpu.memory_space<vmem>>, vector<32x32xf32>
    %cst_15 = arith.constant dense<0.000000e+00> : vector<32x512xf32>
    %25 = tpu.matmul %24, %23, %cst_15 {dimension_numbers = #tpu.dot_dimension_numbers<[1], [0], [0], [1], [0, 0, 1, 1], [], []>} : vector<32x32xf32>, vector<32x512xf32>, vector<32x512xf32> -> vector<32x512xf32>
    %c0_16 = arith.constant 0 : index
    %c0_17 = arith.constant 0 : index
    %26 = vector.load %arg7[%c0_16, %c0_17] : memref<32x16xf32, #tpu.memory_space<vmem>>, vector<32x16xf32>
    %cst_18 = arith.constant dense<0.000000e+00> : vector<32x512xf32>
    %27 = tpu.matmul %26, %9, %cst_18 {dimension_numbers = #tpu.dot_dimension_numbers<[1], [0], [0], [1], [0, 0, 1, 1], [], []>} : vector<32x16xf32>, vector<16x512xf32>, vector<32x512xf32> -> vector<32x512xf32>
    %28 = arith.addf %25, %27 : vector<32x512xf32>
    %c0_19 = arith.constant 0 : index
    %c0_20 = arith.constant 0 : index
    %29 = vector.load %arg8[%c0_19, %c0_20] : memref<32x1xf32, #tpu.memory_space<vmem>>, vector<32x1xf32>
    %30 = vector.broadcast %29 : vector<32x1xf32> to vector<32x512xf32>
    %31 = arith.addf %28, %30 : vector<32x512xf32>
    %cst_21 = arith.constant 0.000000e+00 : f32
    %32 = vector.broadcast %cst_21 : f32 to vector<32x512xf32>
    %33 = arith.maximumf %31, %32 : vector<32x512xf32>
    %c0_22 = arith.constant 0 : index
    %c0_23 = arith.constant 0 : index
    %34 = vector.load %arg9[%c0_22, %c0_23] : memref<32x32xf32, #tpu.memory_space<vmem>>, vector<32x32xf32>
    %cst_24 = arith.constant dense<0.000000e+00> : vector<32x512xf32>
    %35 = tpu.matmul %34, %33, %cst_24 {dimension_numbers = #tpu.dot_dimension_numbers<[1], [0], [0], [1], [0, 0, 1, 1], [], []>} : vector<32x32xf32>, vector<32x512xf32>, vector<32x512xf32> -> vector<32x512xf32>
    %c0_25 = arith.constant 0 : index
    %c0_26 = arith.constant 0 : index
    %36 = vector.load %arg10[%c0_25, %c0_26] : memref<32x1xf32, #tpu.memory_space<vmem>>, vector<32x1xf32>
    %37 = vector.broadcast %36 : vector<32x1xf32> to vector<32x512xf32>
    %38 = arith.addf %35, %37 : vector<32x512xf32>
    %cst_27 = arith.constant 0.000000e+00 : f32
    %39 = vector.broadcast %cst_27 : f32 to vector<32x512xf32>
    %40 = arith.maximumf %38, %39 : vector<32x512xf32>
    %c0_28 = arith.constant 0 : index
    %c0_29 = arith.constant 0 : index
    %41 = vector.load %arg11[%c0_28, %c0_29] : memref<8x32xf32, #tpu.memory_space<vmem>>, vector<8x32xf32>
    %c0_30 = arith.constant 0 : index
    %c0_31 = arith.constant 0 : index
    %42 = vector.load %arg12[%c0_30, %c0_31] : memref<8x1xf32, #tpu.memory_space<vmem>>, vector<8x1xf32>
    %cst_32 = arith.constant dense<0.000000e+00> : vector<8x512xf32>
    %43 = tpu.matmul %41, %40, %cst_32 {dimension_numbers = #tpu.dot_dimension_numbers<[1], [0], [0], [1], [0, 0, 1, 1], [], []>} : vector<8x32xf32>, vector<32x512xf32>, vector<8x512xf32> -> vector<8x512xf32>
    %44 = vector.broadcast %42 : vector<8x1xf32> to vector<8x512xf32>
    %45 = arith.addf %43, %44 : vector<8x512xf32>
    %c0_33 = arith.constant 0 : index
    %c0_34 = arith.constant 0 : index
    %46 = vector.load %arg13[%c0_33, %c0_34] : memref<8x512xf32, #tpu.memory_space<vmem>>, vector<8x512xf32>
    tpu.vector_store %arg13[%c0_33, %c0_34], %45 {strides = array<i32>} : memref<8x512xf32, #tpu.memory_space<vmem>>, vector<8x512xf32>,
    return
  }
  func.func @transform_0(%arg0: i32) -> (i32, i32) {
    %c0_i32 = arith.constant 0 : i32
    %c0_i32_0 = arith.constant 0 : i32
    return %c0_i32, %arg0 : i32, i32
  }
  func.func @transform_1(%arg0: i32) -> (i32, i32) {
    %c0_i32 = arith.constant 0 : i32
    %c0_i32_0 = arith.constant 0 : i32
    %c0_i32_1 = arith.constant 0 : i32
    return %c0_i32, %c0_i32_0 : i32, i32
  }
  func.func @transform_2(%arg0: i32) -> (i32, i32) {
    %c0_i32 = arith.constant 0 : i32
    %c0_i32_0 = arith.constant 0 : i32
    %c0_i32_1 = arith.constant 0 : i32
    return %c0_i32, %c0_i32_0 : i32, i32
  }
  func.func @transform_3(%arg0: i32) -> (i32, i32) {
    %c0_i32 = arith.constant 0 : i32
    %c0_i32_0 = arith.constant 0 : i32
    %c0_i32_1 = arith.constant 0 : i32
    return %c0_i32, %c0_i32_0 : i32, i32
  }
  func.func @transform_4(%arg0: i32) -> (i32, i32) {
    %c0_i32 = arith.constant 0 : i32
    %c0_i32_0 = arith.constant 0 : i32
    %c0_i32_1 = arith.constant 0 : i32
    return %c0_i32, %c0_i32_0 : i32, i32
  }
  func.func @transform_5(%arg0: i32) -> (i32, i32) {
    %c0_i32 = arith.constant 0 : i32
    %c0_i32_0 = arith.constant 0 : i32
    %c0_i32_1 = arith.constant 0 : i32
    return %c0_i32, %c0_i32_0 : i32, i32
  }
  func.func @transform_6(%arg0: i32) -> (i32, i32) {
    %c0_i32 = arith.constant 0 : i32
    %c0_i32_0 = arith.constant 0 : i32
    %c0_i32_1 = arith.constant 0 : i32
    return %c0_i32, %c0_i32_0 : i32, i32
  }
  func.func @transform_7(%arg0: i32) -> (i32, i32) {
    %c0_i32 = arith.constant 0 : i32
    %c0_i32_0 = arith.constant 0 : i32
    %c0_i32_1 = arith.constant 0 : i32
    return %c0_i32, %c0_i32_0 : i32, i32
  }
  func.func @transform_8(%arg0: i32) -> (i32, i32) {
    %c0_i32 = arith.constant 0 : i32
    %c0_i32_0 = arith.constant 0 : i32
    %c0_i32_1 = arith.constant 0 : i32
    return %c0_i32, %c0_i32_0 : i32, i32
  }
  func.func @transform_9(%arg0: i32) -> (i32, i32) {
    %c0_i32 = arith.constant 0 : i32
    %c0_i32_0 = arith.constant 0 : i32
    %c0_i32_1 = arith.constant 0 : i32
    return %c0_i32, %c0_i32_0 : i32, i32
  }
  func.func @transform_10(%arg0: i32) -> (i32, i32) {
    %c0_i32 = arith.constant 0 : i32
    %c0_i32_0 = arith.constant 0 : i32
    %c0_i32_1 = arith.constant 0 : i32
    return %c0_i32, %c0_i32_0 : i32, i32
  }
  func.func @transform_11(%arg0: i32) -> (i32, i32) {
    %c0_i32 = arith.constant 0 : i32
    %c0_i32_0 = arith.constant 0 : i32
    %c0_i32_1 = arith.constant 0 : i32
    return %c0_i32, %c0_i32_0 : i32, i32
  }
  func.func @transform_12(%arg0: i32) -> (i32, i32) {
    %c0_i32 = arith.constant 0 : i32
    %c0_i32_0 = arith.constant 0 : i32
    return %c0_i32, %arg0 : i32, i32
  }
}

</mosaic_0001>

<llo_original>
// kernel: tpu_custom_call.1
$region0: #{tpu_custom_call.1}
  #allocation0 [shape = 'u32[]', space=smem, size = 0x4, offset = 0x4, fixed_abs, tag = 'smem constant byte address 0x4 - core index']
  #allocation1 [shape = 'u32[144,128]{1,0:T(1,128)}', space=vmem, size = 0x12000, scoped, tag = 'internal scratch']
  %s0 = inlined_call_operand.vmem [shape: f32[8,512], index: 0, kind: input, shape index: {}]
  %s1 = inlined_call_operand.vmem [shape: f32[32,16], index: 1, kind: input, shape index: {}]
  %s2 = inlined_call_operand.vmem [shape: f32[32,1], index: 2, kind: input, shape index: {}]
  %s3 = inlined_call_operand.vmem [shape: f32[32,32], index: 3, kind: input, shape index: {}]
  %s4 = inlined_call_operand.vmem [shape: f32[32,1], index: 4, kind: input, shape index: {}]
  %s5 = inlined_call_operand.vmem [shape: f32[32,32], index: 5, kind: input, shape index: {}]
  %s6 = inlined_call_operand.vmem [shape: f32[32,16], index: 6, kind: input, shape index: {}]
  %s7 = inlined_call_operand.vmem [shape: f32[32,1], index: 7, kind: input, shape index: {}]
  %s8 = inlined_call_operand.vmem [shape: f32[32,32], index: 8, kind: input, shape index: {}]
  %s9 = inlined_call_operand.vmem [shape: f32[32,1], index: 9, kind: input, shape index: {}]
  %s10 = inlined_call_operand.vmem [shape: f32[8,32], index: 10, kind: input, shape index: {}]
  %s11 = inlined_call_operand.vmem [shape: f32[8,1], index: 11, kind: input, shape index: {}]
  %s12 = inlined_call_operand.hbm [shape: f32[8,512], index: 12, kind: output, shape index: {}]
  %s13 = sld [smem:[#allocation0]]
  $region58: #{tpu_custom_call.1} parent=0
    _
  %s15 = ssub.s32 1, %s13
  %s16 = scalar_select 0, %s15, %s13
  $region1: #{tpu_custom_call.1} parent=0
    #allocation2 [shape = 'u8[16384]{0}', space=vmem, size = 0x4000, scoped, tag = 'output window, operand 0, single buffered']
    #allocation3 [shape = 's32[1]{0}', space=sflag, size = 0x4, scoped, tag = 'scoped memory for tpu_custom_call.1']
    %17 = vsyncpa [#allocation3], 0
    // Predicated region
    $region2: #{tpu_custom_call.1} parent=1 // pred_check
      _
    $region3: #{tpu_custom_call.1} parent=1 // pred_check_branch
      %19 = sbr.rel (0) target = $region5
    $region4: #{tpu_custom_call.1} parent=1 // pred_region
      _
    $region5: #{tpu_custom_call.1} parent=1 // pred_fallthru
      _
    // Predicated region
    $region6: #{tpu_custom_call.1} parent=1 // pred_check
      _
    $region7: #{tpu_custom_call.1} parent=1 // pred_check_branch
      %21 = sbr.rel (0) target = $region9
    $region8: #{tpu_custom_call.1} parent=1 // pred_region
      _
    $region9: #{tpu_custom_call.1} parent=1 // pred_fallthru
      _
    // Predicated region
    $region10: #{tpu_custom_call.1} parent=1 // pred_check
      _
    $region11: #{tpu_custom_call.1} parent=1 // pred_check_branch
      %23 = sbr.rel (0) target = $region13
    $region12: #{tpu_custom_call.1} parent=1 // pred_region
      _
    $region13: #{tpu_custom_call.1} parent=1 // pred_fallthru
      _
    // Predicated region
    $region14: #{tpu_custom_call.1} parent=1 // pred_check
      _
    $region15: #{tpu_custom_call.1} parent=1 // pred_check_branch
      %25 = sbr.rel (0) target = $region17
    $region16: #{tpu_custom_call.1} parent=1 // pred_region
      _
    $region17: #{tpu_custom_call.1} parent=1 // pred_fallthru
      _
    // Predicated region
    $region18: #{tpu_custom_call.1} parent=1 // pred_check
      _
    $region19: #{tpu_custom_call.1} parent=1 // pred_check_branch
      %27 = sbr.rel (0) target = $region21
    $region20: #{tpu_custom_call.1} parent=1 // pred_region
      _
    $region21: #{tpu_custom_call.1} parent=1 // pred_fallthru
      _
    // Predicated region
    $region22: #{tpu_custom_call.1} parent=1 // pred_check
      _
    $region23: #{tpu_custom_call.1} parent=1 // pred_check_branch
      %29 = sbr.rel (0) target = $region25
    $region24: #{tpu_custom_call.1} parent=1 // pred_region
      _
    $region25: #{tpu_custom_call.1} parent=1 // pred_fallthru
      _
    // Predicated region
    $region26: #{tpu_custom_call.1} parent=1 // pred_check
      _
    $region27: #{tpu_custom_call.1} parent=1 // pred_check_branch
      %31 = sbr.rel (0) target = $region29
    $region28: #{tpu_custom_call.1} parent=1 // pred_region
      _
    $region29: #{tpu_custom_call.1} parent=1 // pred_fallthru
      _
    // Predicated region
    $region30: #{tpu_custom_call.1} parent=1 // pred_check
      _
    $region31: #{tpu_custom_call.1} parent=1 // pred_check_branch
      %33 = sbr.rel (0) target = $region33
    $region32: #{tpu_custom_call.1} parent=1 // pred_region
      _
    $region33: #{tpu_custom_call.1} parent=1 // pred_fallthru
      _
    // Predicated region
    $region34: #{tpu_custom_call.1} parent=1 // pred_check
      _
    $region35: #{tpu_custom_call.1} parent=1 // pred_check_branch
      %35 = sbr.rel (0) target = $region37
    $region36: #{tpu_custom_call.1} parent=1 // pred_region
      _
    $region37: #{tpu_custom_call.1} parent=1 // pred_fallthru
      _
    // Predicated region
    $region38: #{tpu_custom_call.1} parent=1 // pred_check
      _
    $region39: #{tpu_custom_call.1} parent=1 // pred_check_branch
      %37 = sbr.rel (0) target = $region41
    $region40: #{tpu_custom_call.1} parent=1 // pred_region
      _
    $region41: #{tpu_custom_call.1} parent=1 // pred_fallthru
      _
    // Predicated region
    $region42: #{tpu_custom_call.1} parent=1 // pred_check
      _
    $region43: #{tpu_custom_call.1} parent=1 // pred_check_branch
      %39 = sbr.rel (0) target = $region45
    $region44: #{tpu_custom_call.1} parent=1 // pred_region
      _
    $region45: #{tpu_custom_call.1} parent=1 // pred_fallthru
      _
    // Predicated region
    $region46: #{tpu_custom_call.1} parent=1 // pred_check
      _
    $region47: #{tpu_custom_call.1} parent=1 // pred_check_branch
      %41 = sbr.rel (0) target = $region49
    $region48: #{tpu_custom_call.1} parent=1 // pred_region
      _
    $region49: #{tpu_custom_call.1} parent=1 // pred_fallthru
      _
    %v42 = vld [vmem:[%s0] sm:$0xff]
    %v43 = vld [vmem:[%s0 + $0x8] sm:$0xff]
    %v44 = vld [vmem:[%s0 + $0x10] sm:$0xff]
    %v45 = vld [vmem:[%s0 + $0x18] sm:$0xff]
    %v46 = vlaneseq
    %v47 = vshrl.u32 %v46, 7
    %v48 = vand.u32 2147483647, %v42
    %vm49 = vcmp.le.f32.partialorder %v48, 0.7853982
    %vm50 = vcmp.lt.s32.totalorder %v42, 0
    %v51 = vand.u32 %v42, 2139095040
    %v52 = vshrl.u32 %v51, 23
    %v53 = vsub.s32 %v52, 127
    %v54 = vand.u32 2147483647, %v42
    %v55 = vand.u32 %v54, 8388607
    %v56 = vor.u32 %v55, 8388608
    %v57 = vsub.s32 0, %v56
    %v58 = vadd.s32 %v53, 1
    %vm59 = vcmp.gt.s32.totalorder %v58, 0
    %v60 = vsel %vm59, %v58, 0
    %v61 = vshrl.u32 %v60, 5
    %v62 = vand.u32 %v60, 31
    %v63 = vsub.s32 32, %v62
    %v64 = vshrl.u32 683565275, %v63
    %v65 = vshll.u32 683565275, %v62
    %v66 = vshrl.u32 2475754826, %v63
    %v67 = vor.u32 %v65, %v66
    %v68 = vshll.u32 2475754826, %v62
    %v69 = vshrl.u32 2131351028, %v63
    %v70 = vor.u32 %v68, %v69
    %v71 = vshll.u32 2131351028, %v62
    %v72 = vshrl.u32 2102212464, %v63
    %v73 = vor.u32 %v71, %v72
    %v74 = vshll.u32 2102212464, %v62
    %v75 = vshrl.u32 920167782, %v63
    %v76 = vor.u32 %v74, %v75
    %v77 = vshll.u32 920167782, %v62
    %v78 = vshrl.u32 1326507024, %v63
    %v79 = vor.u32 %v77, %v78
    %vm80 = vcmp.lt.s32.totalorder %v61, 1
    %vm81 = vcmp.lt.s32.totalorder %v61, 2
    %vm82 = vcmp.lt.s32.totalorder %v61, 3
    %vm83 = vcmp.lt.s32.totalorder %v61, 4
    %v84 = vsel %vm80, %v64, %v67
    %v85 = vsel %vm83, %v73, 2102212464
    %v86 = vsel %vm82, %v70, %v85
    %v87 = vsel %vm81, %v84, %v86
    %v88 = vsel %vm80, %v67, %v70
    %v89 = vsel %vm83, %v76, 920167782
    %v90 = vsel %vm82, %v73, %v89
    %v91 = vsel %vm81, %v88, %v90
    %v92 = vsel %vm80, %v70, %v73
    %v93 = vsel %vm83, %v79, 1326507024
    %v94 = vsel %vm82, %v76, %v93
    %v95 = vsel %vm81, %v92, %v94
    %v96 = vshll.u32 %v56, 8
    %v97 = vmul.u32.u64.compose %v96, %v95
    %v98 = vextract.low.u32 %v97
    %v99 = vextract.high.u32 %v97
    %v100 = vmul.u32.u64.compose %v96, %v91
    %v101 = vextract.low.u32 %v100
    %v102 = vextract.high.u32 %v100
    %v103 = vmul.u32 %v96, %v87
    %v104 = vadd.s32 %v99, %v101
    %vm105 = vc.u32 %v99, %v101
    %v106 = vadd.s32 %v102, 1
    %v107 = vsel %vm105, %v106, %v102
    %v108 = vadd.s32 %v103, %v107
    %v109 = vadd.s32 %v108, 536870912
    %v110 = vshrl.u32 %v109, 30
    %v111 = vshll.u32 %v110, 30
    %v112 = vsub.s32 %v108, %v111
    %vm113 = vcmp.lt.s32.totalorder %v112, 0
    %v114 = vsub.s32 0, %v112
    %v115 = vsel %vm113, %v114, %v112
    %v116 = vclz %v115
    %v117 = vsub.s32 %v116, 2
    %vm118 = vcmp.gt.s32.totalorder 0, %v117
    %v119 = vsel %vm118, 0, %v117
    %v120 = vsub.s32 32, %v119
    %v121 = vshll.u32 %v112, %v119
    %v122 = vshrl.u32 %v104, %v120
    %v123 = vor.u32 %v121, %v122
    %v124 = vsub.s32 4294967266, %v119
    %v125 = vadd.s32 %v124, 127
    %v126 = vshll.u32 %v125, 23
    %v127 = vor.u32 4788187, %v126
    %v128 = vand.u32 2147483647, %v127
    %v130 = vcvt.s32.f32 %v123
    %v131 = vmul.f32 %v130, %v128
    %v132 = vxor.u32 %v131, 2147483648
    %v133 = vsel %vm50, %v132, %v131
    %v134 = vsub.s32 4, %v110
    %v135 = vsel %vm50, %v134, %v110
    %v136 = vsel %vm49, %v42, %v133
    %v137 = vsel %vm49, 0, %v135
    %v138 = vcosq.f32.pop %v136
    %v139 = vsinq.f32.pop %v136
    %vm140 = vweird.f32 %v42
    %v141 = vadd.s32 %v137, 3
    %v142 = vand.u32 %v141, 3
    %vm143 = vcmp.lt.s32.totalorder %v142, 2
    %vm144 = vcmp.eq.s32.totalorder %v142, 0
    %v145 = vxor.u32 %v139, 2147483648
    %v146 = vsel %vm144, %v138, %v145
    %vm147 = vcmp.eq.s32.totalorder %v142, 2
    %v148 = vxor.u32 %v138, 2147483648
    %v149 = vsel %vm147, %v148, %v139
    %v150 = vsel %vm143, %v146, %v149
    %v151 = vsel %vm140, nan, %v150
    %v152 = vand.u32 2147483647, %v43
    %vm153 = vcmp.le.f32.partialorder %v152, 0.7853982
    %vm154 = vcmp.lt.s32.totalorder %v43, 0
    %v155 = vand.u32 %v43, 2139095040
    %v156 = vshrl.u32 %v155, 23
    %v157 = vsub.s32 %v156, 127
    %v158 = vand.u32 2147483647, %v43
    %v159 = vand.u32 %v158, 8388607
    %v160 = vor.u32 %v159, 8388608
    %v161 = vsub.s32 0, %v160
    %v162 = vadd.s32 %v157, 1
    %vm163 = vcmp.gt.s32.totalorder %v162, 0
    %v164 = vsel %vm163, %v162, 0
    %v165 = vshrl.u32 %v164, 5
    %v166 = vand.u32 %v164, 31
    %v167 = vsub.s32 32, %v166
    %v168 = vshrl.u32 683565275, %v167
    %v169 = vshll.u32 683565275, %v166
    %v170 = vshrl.u32 2475754826, %v167
    %v171 = vor.u32 %v169, %v170
    %v172 = vshll.u32 2475754826, %v166
    %v173 = vshrl.u32 2131351028, %v167
    %v174 = vor.u32 %v172, %v173
    %v175 = vshll.u32 2131351028, %v166
    %v176 = vshrl.u32 2102212464, %v167
    %v177 = vor.u32 %v175, %v176
    %v178 = vshll.u32 2102212464, %v166
    %v179 = vshrl.u32 920167782, %v167
    %v180 = vor.u32 %v178, %v179
    %v181 = vshll.u32 920167782, %v166
    %v182 = vshrl.u32 1326507024, %v167
    %v183 = vor.u32 %v181, %v182
    %vm184 = vcmp.lt.s32.totalorder %v165, 1
    %vm185 = vcmp.lt.s32.totalorder %v165, 2
    %vm186 = vcmp.lt.s32.totalorder %v165, 3
    %vm187 = vcmp.lt.s32.totalorder %v165, 4
    %v188 = vsel %vm184, %v168, %v171
    %v189 = vsel %vm187, %v177, 2102212464
    %v190 = vsel %vm186, %v174, %v189
    %v191 = vsel %vm185, %v188, %v190
    %v192 = vsel %vm184, %v171, %v174
    %v193 = vsel %vm187, %v180, 920167782
    %v194 = vsel %vm186, %v177, %v193
    %v195 = vsel %vm185, %v192, %v194
    %v196 = vsel %vm184, %v174, %v177
    %v197 = vsel %vm187, %v183, 1326507024
    %v198 = vsel %vm186, %v180, %v197
    %v199 = vsel %vm185, %v196, %v198
    %v200 = vshll.u32 %v160, 8
    %v201 = vmul.u32.u64.compose %v200, %v199
    %v202 = vextract.low.u32 %v201
    %v203 = vextract.high.u32 %v201
    %v204 = vmul.u32.u64.compose %v200, %v195
    %v205 = vextract.low.u32 %v204
    %v206 = vextract.high.u32 %v204
    %v207 = vmul.u32 %v200, %v191
    %v208 = vadd.s32 %v203, %v205
    %vm209 = vc.u32 %v203, %v205
    %v210 = vadd.s32 %v206, 1
    %v211 = vsel %vm209, %v210, %v206
    %v212 = vadd.s32 %v207, %v211
    %v213 = vadd.s32 %v212, 536870912
    %v214 = vshrl.u32 %v213, 30
    %v215 = vshll.u32 %v214, 30
    %v216 = vsub.s32 %v212, %v215
    %vm217 = vcmp.lt.s32.totalorder %v216, 0
    %v218 = vsub.s32 0, %v216
    %v219 = vsel %vm217, %v218, %v216
    %v220 = vclz %v219
    %v221 = vsub.s32 %v220, 2
    %vm222 = vcmp.gt.s32.totalorder 0, %v221
    %v223 = vsel %vm222, 0, %v221
    %v224 = vsub.s32 32, %v223
    %v225 = vshll.u32 %v216, %v223
    %v226 = vshrl.u32 %v208, %v224
    %v227 = vor.u32 %v225, %v226
    %v228 = vsub.s32 4294967266, %v223
    %v229 = vadd.s32 %v228, 127
    %v230 = vshll.u32 %v229, 23
    %v231 = vor.u32 4788187, %v230
    %v232 = vand.u32 2147483647, %v231
    %v234 = vcvt.s32.f32 %v227
    %v235 = vmul.f32 %v234, %v232
    %v236 = vxor.u32 %v235, 2147483648
    %v237 = vsel %vm154, %v236, %v235
    %v238 = vsub.s32 4, %v214
    %v239 = vsel %vm154, %v238, %v214
    %v240 = vsel %vm153, %v43, %v237
    %v241 = vsel %vm153, 0, %v239
    %v242 = vcosq.f32.pop %v240
    %v243 = vsinq.f32.pop %v240
    %vm244 = vweird.f32 %v43
    %v245 = vadd.s32 %v241, 3
    %v246 = vand.u32 %v245, 3
    %vm247 = vcmp.lt.s32.totalorder %v246, 2
    %vm248 = vcmp.eq.s32.totalorder %v246, 0
    %v249 = vxor.u32 %v243, 2147483648
    %v250 = vsel %vm248, %v242, %v249
    %vm251 = vcmp.eq.s32.totalorder %v246, 2
    %v252 = vxor.u32 %v242, 2147483648
    %v253 = vsel %vm251, %v252, %v243
    %v254 = vsel %vm247, %v250, %v253
    %v255 = vsel %vm244, nan, %v254
    %v256 = vand.u32 2147483647, %v44
    %vm257 = vcmp.le.f32.partialorder %v256, 0.7853982
    %vm258 = vcmp.lt.s32.totalorder %v44, 0
    %v259 = vand.u32 %v44, 2139095040
    %v260 = vshrl.u32 %v259, 23
    %v261 = vsub.s32 %v260, 127
    %v262 = vand.u32 2147483647, %v44
    %v263 = vand.u32 %v262, 8388607
    %v264 = vor.u32 %v263, 8388608
    %v265 = vsub.s32 0, %v264
    %v266 = vadd.s32 %v261, 1
    %vm267 = vcmp.gt.s32.totalorder %v266, 0
    %v268 = vsel %vm267, %v266, 0
    %v269 = vshrl.u32 %v268, 5
    %v270 = vand.u32 %v268, 31
    %v271 = vsub.s32 32, %v270
    %v272 = vshrl.u32 683565275, %v271
    %v273 = vshll.u32 683565275, %v270
    %v274 = vshrl.u32 2475754826, %v271
    %v275 = vor.u32 %v273, %v274
    %v276 = vshll.u32 2475754826, %v270
    %v277 = vshrl.u32 2131351028, %v271
    %v278 = vor.u32 %v276, %v277
    %v279 = vshll.u32 2131351028, %v270
    %v280 = vshrl.u32 2102212464, %v271
    %v281 = vor.u32 %v279, %v280
    %v282 = vshll.u32 2102212464, %v270
    %v283 = vshrl.u32 920167782, %v271
    %v284 = vor.u32 %v282, %v283
    %v285 = vshll.u32 920167782, %v270
    %v286 = vshrl.u32 1326507024, %v271
    %v287 = vor.u32 %v285, %v286
    %vm288 = vcmp.lt.s32.totalorder %v269, 1
    %vm289 = vcmp.lt.s32.totalorder %v269, 2
    %vm290 = vcmp.lt.s32.totalorder %v269, 3
    %vm291 = vcmp.lt.s32.totalorder %v269, 4
    %v292 = vsel %vm288, %v272, %v275
    %v293 = vsel %vm291, %v281, 2102212464
    %v294 = vsel %vm290, %v278, %v293
    %v295 = vsel %vm289, %v292, %v294
    %v296 = vsel %vm288, %v275, %v278
    %v297 = vsel %vm291, %v284, 920167782
    %v298 = vsel %vm290, %v281, %v297
    %v299 = vsel %vm289, %v296, %v298
    %v300 = vsel %vm288, %v278, %v281
    %v301 = vsel %vm291, %v287, 1326507024
    %v302 = vsel %vm290, %v284, %v301
    %v303 = vsel %vm289, %v300, %v302
    %v304 = vshll.u32 %v264, 8
    %v305 = vmul.u32.u64.compose %v304, %v303
    %v306 = vextract.low.u32 %v305
    %v307 = vextract.high.u32 %v305
    %v308 = vmul.u32.u64.compose %v304, %v299
    %v309 = vextract.low.u32 %v308
    %v310 = vextract.high.u32 %v308
    %v311 = vmul.u32 %v304, %v295
    %v312 = vadd.s32 %v307, %v309
    %vm313 = vc.u32 %v307, %v309
    %v314 = vadd.s32 %v310, 1
    %v315 = vsel %vm313, %v314, %v310
    %v316 = vadd.s32 %v311, %v315
    %v317 = vadd.s32 %v316, 536870912
    %v318 = vshrl.u32 %v317, 30
    %v319 = vshll.u32 %v318, 30
    %v320 = vsub.s32 %v316, %v319
    %vm321 = vcmp.lt.s32.totalorder %v320, 0
    %v322 = vsub.s32 0, %v320
    %v323 = vsel %vm321, %v322, %v320
    %v324 = vclz %v323
    %v325 = vsub.s32 %v324, 2
    %vm326 = vcmp.gt.s32.totalorder 0, %v325
    %v327 = vsel %vm326, 0, %v325
    %v328 = vsub.s32 32, %v327
    %v329 = vshll.u32 %v320, %v327
    %v330 = vshrl.u32 %v312, %v328
    %v331 = vor.u32 %v329, %v330
    %v332 = vsub.s32 4294967266, %v327
    %v333 = vadd.s32 %v332, 127
    %v334 = vshll.u32 %v333, 23
    %v335 = vor.u32 4788187, %v334
    %v336 = vand.u32 2147483647, %v335
    %v338 = vcvt.s32.f32 %v331
    %v339 = vmul.f32 %v338, %v336
    %v340 = vxor.u32 %v339, 2147483648
    %v341 = vsel %vm258, %v340, %v339
    %v342 = vsub.s32 4, %v318
    %v343 = vsel %vm258, %v342, %v318
    %v344 = vsel %vm257, %v44, %v341
    %v345 = vsel %vm257, 0, %v343
    %v346 = vcosq.f32.pop %v344
    %v347 = vsinq.f32.pop %v344
    %vm348 = vweird.f32 %v44
    %v349 = vadd.s32 %v345, 3
    %v350 = vand.u32 %v349, 3
    %vm351 = vcmp.lt.s32.totalorder %v350, 2
    %vm352 = vcmp.eq.s32.totalorder %v350, 0
    %v353 = vxor.u32 %v347, 2147483648
    %v354 = vsel %vm352, %v346, %v353
    %vm355 = vcmp.eq.s32.totalorder %v350, 2
    %v356 = vxor.u32 %v346, 2147483648
    %v357 = vsel %vm355, %v356, %v347
    %v358 = vsel %vm351, %v354, %v357
    %v359 = vsel %vm348, nan, %v358
    %v360 = vand.u32 2147483647, %v45
    %vm361 = vcmp.le.f32.partialorder %v360, 0.7853982
    %vm362 = vcmp.lt.s32.totalorder %v45, 0
    %v363 = vand.u32 %v45, 2139095040
    %v364 = vshrl.u32 %v363, 23
    %v365 = vsub.s32 %v364, 127
    %v366 = vand.u32 2147483647, %v45
    %v367 = vand.u32 %v366, 8388607
    %v368 = vor.u32 %v367, 8388608
    %v369 = vsub.s32 0, %v368
    %v370 = vadd.s32 %v365, 1
    %vm371 = vcmp.gt.s32.totalorder %v370, 0
    %v372 = vsel %vm371, %v370, 0
    %v373 = vshrl.u32 %v372, 5
    %v374 = vand.u32 %v372, 31
    %v375 = vsub.s32 32, %v374
    %v376 = vshrl.u32 683565275, %v375
    %v377 = vshll.u32 683565275, %v374
    %v378 = vshrl.u32 2475754826, %v375
    %v379 = vor.u32 %v377, %v378
    %v380 = vshll.u32 2475754826, %v374
    %v381 = vshrl.u32 2131351028, %v375
    %v382 = vor.u32 %v380, %v381
    %v383 = vshll.u32 2131351028, %v374
    %v384 = vshrl.u32 2102212464, %v375
    %v385 = vor.u32 %v383, %v384
    %v386 = vshll.u32 2102212464, %v374
    %v387 = vshrl.u32 920167782, %v375
    %v388 = vor.u32 %v386, %v387
    %v389 = vshll.u32 920167782, %v374
    %v390 = vshrl.u32 1326507024, %v375
    %v391 = vor.u32 %v389, %v390
    %vm392 = vcmp.lt.s32.totalorder %v373, 1
    %vm393 = vcmp.lt.s32.totalorder %v373, 2
    %vm394 = vcmp.lt.s32.totalorder %v373, 3
    %vm395 = vcmp.lt.s32.totalorder %v373, 4
    %v396 = vsel %vm392, %v376, %v379
    %v397 = vsel %vm395, %v385, 2102212464
    %v398 = vsel %vm394, %v382, %v397
    %v399 = vsel %vm393, %v396, %v398
    %v400 = vsel %vm392, %v379, %v382
    %v401 = vsel %vm395, %v388, 920167782
    %v402 = vsel %vm394, %v385, %v401
    %v403 = vsel %vm393, %v400, %v402
    %v404 = vsel %vm392, %v382, %v385
    %v405 = vsel %vm395, %v391, 1326507024
    %v406 = vsel %vm394, %v388, %v405
    %v407 = vsel %vm393, %v404, %v406
    %v408 = vshll.u32 %v368, 8
    %v409 = vmul.u32.u64.compose %v408, %v407
    %v410 = vextract.low.u32 %v409
    %v411 = vextract.high.u32 %v409
    %v412 = vmul.u32.u64.compose %v408, %v403
    %v413 = vextract.low.u32 %v412
    %v414 = vextract.high.u32 %v412
    %v415 = vmul.u32 %v408, %v399
    %v416 = vadd.s32 %v411, %v413
    %vm417 = vc.u32 %v411, %v413
    %v418 = vadd.s32 %v414, 1
    %v419 = vsel %vm417, %v418, %v414
    %v420 = vadd.s32 %v415, %v419
    %v421 = vadd.s32 %v420, 536870912
    %v422 = vshrl.u32 %v421, 30
    %v423 = vshll.u32 %v422, 30
    %v424 = vsub.s32 %v420, %v423
    %vm425 = vcmp.lt.s32.totalorder %v424, 0
    %v426 = vsub.s32 0, %v424
    %v427 = vsel %vm425, %v426, %v424
    %v428 = vclz %v427
    %v429 = vsub.s32 %v428, 2
    %vm430 = vcmp.gt.s32.totalorder 0, %v429
    %v431 = vsel %vm430, 0, %v429
    %v432 = vsub.s32 32, %v431
    %v433 = vshll.u32 %v424, %v431
    %v434 = vshrl.u32 %v416, %v432
    %v435 = vor.u32 %v433, %v434
    %v436 = vsub.s32 4294967266, %v431
    %v437 = vadd.s32 %v436, 127
    %v438 = vshll.u32 %v437, 23
    %v439 = vor.u32 4788187, %v438
    %v440 = vand.u32 2147483647, %v439
    %v442 = vcvt.s32.f32 %v435
    %v443 = vmul.f32 %v442, %v440
    %v444 = vxor.u32 %v443, 2147483648
    %v445 = vsel %vm362, %v444, %v443
    %v446 = vsub.s32 4, %v422
    %v447 = vsel %vm362, %v446, %v422
    %v448 = vsel %vm361, %v45, %v445
    %v449 = vsel %vm361, 0, %v447
    %v450 = vcosq.f32.pop %v448
    %v451 = vsinq.f32.pop %v448
    %vm452 = vweird.f32 %v45
    %v453 = vadd.s32 %v449, 3
    %v454 = vand.u32 %v453, 3
    %vm455 = vcmp.lt.s32.totalorder %v454, 2
    %vm456 = vcmp.eq.s32.totalorder %v454, 0
    %v457 = vxor.u32 %v451, 2147483648
    %v458 = vsel %vm456, %v450, %v457
    %vm459 = vcmp.eq.s32.totalorder %v454, 2
    %v460 = vxor.u32 %v450, 2147483648
    %v461 = vsel %vm459, %v460, %v451
    %v462 = vsel %vm455, %v458, %v461
    %v463 = vsel %vm452, nan, %v462
    %vm464 = vcmp.lt.s32.totalorder %v47, 3
    %v465 = vsel %vm464, %v151, %v42
    %v466 = vsel %vm464, %v255, %v43
    %v467 = vsel %vm464, %v359, %v44
    %v468 = vsel %vm464, %v463, %v45
    %v469 = vand.u32 2147483647, %v42
    %vm470 = vcmp.le.f32.partialorder %v469, 0.7853982
    %vm471 = vcmp.lt.s32.totalorder %v42, 0
    %v472 = vand.u32 %v42, 2139095040
    %v473 = vshrl.u32 %v472, 23
    %v474 = vsub.s32 %v473, 127
    %v475 = vand.u32 2147483647, %v42
    %v476 = vand.u32 %v475, 8388607
    %v477 = vor.u32 %v476, 8388608
    %v478 = vsub.s32 0, %v477
    %v479 = vadd.s32 %v474, 1
    %vm480 = vcmp.gt.s32.totalorder %v479, 0
    %v481 = vsel %vm480, %v479, 0
    %v482 = vshrl.u32 %v481, 5
    %v483 = vand.u32 %v481, 31
    %v484 = vsub.s32 32, %v483
    %v485 = vshrl.u32 683565275, %v484
    %v486 = vshll.u32 683565275, %v483
    %v487 = vshrl.u32 2475754826, %v484
    %v488 = vor.u32 %v486, %v487
    %v489 = vshll.u32 2475754826, %v483
    %v490 = vshrl.u32 2131351028, %v484
    %v491 = vor.u32 %v489, %v490
    %v492 = vshll.u32 2131351028, %v483
    %v493 = vshrl.u32 2102212464, %v484
    %v494 = vor.u32 %v492, %v493
    %v495 = vshll.u32 2102212464, %v483
    %v496 = vshrl.u32 920167782, %v484
    %v497 = vor.u32 %v495, %v496
    %v498 = vshll.u32 920167782, %v483
    %v499 = vshrl.u32 1326507024, %v484
    %v500 = vor.u32 %v498, %v499
    %vm501 = vcmp.lt.s32.totalorder %v482, 1
    %vm502 = vcmp.lt.s32.totalorder %v482, 2
    %vm503 = vcmp.lt.s32.totalorder %v482, 3
    %vm504 = vcmp.lt.s32.totalorder %v482, 4
    %v505 = vsel %vm501, %v485, %v488
    %v506 = vsel %vm504, %v494, 2102212464
    %v507 = vsel %vm503, %v491, %v506
    %v508 = vsel %vm502, %v505, %v507
    %v509 = vsel %vm501, %v488, %v491
    %v510 = vsel %vm504, %v497, 920167782
    %v511 = vsel %vm503, %v494, %v510
    %v512 = vsel %vm502, %v509, %v511
    %v513 = vsel %vm501, %v491, %v494
    %v514 = vsel %vm504, %v500, 1326507024
    %v515 = vsel %vm503, %v497, %v514
    %v516 = vsel %vm502, %v513, %v515
    %v517 = vshll.u32 %v477, 8
    %v518 = vmul.u32.u64.compose %v517, %v516
    %v519 = vextract.low.u32 %v518
    %v520 = vextract.high.u32 %v518
    %v521 = vmul.u32.u64.compose %v517, %v512
    %v522 = vextract.low.u32 %v521
    %v523 = vextract.high.u32 %v521
    %v524 = vmul.u32 %v517, %v508
    %v525 = vadd.s32 %v520, %v522
    %vm526 = vc.u32 %v520, %v522
    %v527 = vadd.s32 %v523, 1
    %v528 = vsel %vm526, %v527, %v523
    %v529 = vadd.s32 %v524, %v528
    %v530 = vadd.s32 %v529, 536870912
    %v531 = vshrl.u32 %v530, 30
    %v532 = vshll.u32 %v531, 30
    %v533 = vsub.s32 %v529, %v532
    %vm534 = vcmp.lt.s32.totalorder %v533, 0
    %v535 = vsub.s32 0, %v533
    %v536 = vsel %vm534, %v535, %v533
    %v537 = vclz %v536
    %v538 = vsub.s32 %v537, 2
    %vm539 = vcmp.gt.s32.totalorder 0, %v538
    %v540 = vsel %vm539, 0, %v538
    %v541 = vsub.s32 32, %v540
    %v542 = vshll.u32 %v533, %v540
    %v543 = vshrl.u32 %v525, %v541
    %v544 = vor.u32 %v542, %v543
    %v545 = vsub.s32 4294967266, %v540
    %v546 = vadd.s32 %v545, 127
    %v547 = vshll.u32 %v546, 23
    %v548 = vor.u32 4788187, %v547
    %v549 = vand.u32 2147483647, %v548
    %v551 = vcvt.s32.f32 %v544
    %v552 = vmul.f32 %v551, %v549
    %v553 = vxor.u32 %v552, 2147483648
    %v554 = vsel %vm471, %v553, %v552
    %v555 = vsub.s32 4, %v531
    %v556 = vsel %vm471, %v555, %v531
    %v557 = vsel %vm470, %v42, %v554
    %v558 = vsel %vm470, 0, %v556
    %v559 = vcosq.f32.pop %v557
    %v560 = vsinq.f32.pop %v557
    %vm561 = vweird.f32 %v42
    %v562 = vand.u32 %v558, 3
    %vm563 = vcmp.lt.s32.totalorder %v562, 2
    %vm564 = vcmp.eq.s32.totalorder %v562, 0
    %v565 = vxor.u32 %v560, 2147483648
    %v566 = vsel %vm564, %v559, %v565
    %vm567 = vcmp.eq.s32.totalorder %v562, 2
    %v568 = vxor.u32 %v559, 2147483648
    %v569 = vsel %vm567, %v568, %v560
    %v570 = vsel %vm563, %v566, %v569
    %v571 = vsel %vm561, nan, %v570
    %v572 = vand.u32 2147483647, %v43
    %vm573 = vcmp.le.f32.partialorder %v572, 0.7853982
    %vm574 = vcmp.lt.s32.totalorder %v43, 0
    %v575 = vand.u32 %v43, 2139095040
    %v576 = vshrl.u32 %v575, 23
    %v577 = vsub.s32 %v576, 127
    %v578 = vand.u32 2147483647, %v43
    %v579 = vand.u32 %v578, 8388607
    %v580 = vor.u32 %v579, 8388608
    %v581 = vsub.s32 0, %v580
    %v582 = vadd.s32 %v577, 1
    %vm583 = vcmp.gt.s32.totalorder %v582, 0
    %v584 = vsel %vm583, %v582, 0
    %v585 = vshrl.u32 %v584, 5
    %v586 = vand.u32 %v584, 31
    %v587 = vsub.s32 32, %v586
    %v588 = vshrl.u32 683565275, %v587
    %v589 = vshll.u32 683565275, %v586
    %v590 = vshrl.u32 2475754826, %v587
    %v591 = vor.u32 %v589, %v590
    %v592 = vshll.u32 2475754826, %v586
    %v593 = vshrl.u32 2131351028, %v587
    %v594 = vor.u32 %v592, %v593
    %v595 = vshll.u32 2131351028, %v586
    %v596 = vshrl.u32 2102212464, %v587
    %v597 = vor.u32 %v595, %v596
    %v598 = vshll.u32 2102212464, %v586
    %v599 = vshrl.u32 920167782, %v587
    %v600 = vor.u32 %v598, %v599
    %v601 = vshll.u32 920167782, %v586
    %v602 = vshrl.u32 1326507024, %v587
    %v603 = vor.u32 %v601, %v602
    %vm604 = vcmp.lt.s32.totalorder %v585, 1
    %vm605 = vcmp.lt.s32.totalorder %v585, 2
    %vm606 = vcmp.lt.s32.totalorder %v585, 3
    %vm607 = vcmp.lt.s32.totalorder %v585, 4
    %v608 = vsel %vm604, %v588, %v591
    %v609 = vsel %vm607, %v597, 2102212464
    %v610 = vsel %vm606, %v594, %v609
    %v611 = vsel %vm605, %v608, %v610
    %v612 = vsel %vm604, %v591, %v594
    %v613 = vsel %vm607, %v600, 920167782
    %v614 = vsel %vm606, %v597, %v613
    %v615 = vsel %vm605, %v612, %v614
    %v616 = vsel %vm604, %v594, %v597
    %v617 = vsel %vm607, %v603, 1326507024
    %v618 = vsel %vm606, %v600, %v617
    %v619 = vsel %vm605, %v616, %v618
    %v620 = vshll.u32 %v580, 8
    %v621 = vmul.u32.u64.compose %v620, %v619
    %v622 = vextract.low.u32 %v621
    %v623 = vextract.high.u32 %v621
    %v624 = vmul.u32.u64.compose %v620, %v615
    %v625 = vextract.low.u32 %v624
    %v626 = vextract.high.u32 %v624
    %v627 = vmul.u32 %v620, %v611
    %v628 = vadd.s32 %v623, %v625
    %vm629 = vc.u32 %v623, %v625
    %v630 = vadd.s32 %v626, 1
    %v631 = vsel %vm629, %v630, %v626
    %v632 = vadd.s32 %v627, %v631
    %v633 = vadd.s32 %v632, 536870912
    %v634 = vshrl.u32 %v633, 30
    %v635 = vshll.u32 %v634, 30
    %v636 = vsub.s32 %v632, %v635
    %vm637 = vcmp.lt.s32.totalorder %v636, 0
    %v638 = vsub.s32 0, %v636
    %v639 = vsel %vm637, %v638, %v636
    %v640 = vclz %v639
    %v641 = vsub.s32 %v640, 2
    %vm642 = vcmp.gt.s32.totalorder 0, %v641
    %v643 = vsel %vm642, 0, %v641
    %v644 = vsub.s32 32, %v643
    %v645 = vshll.u32 %v636, %v643
    %v646 = vshrl.u32 %v628, %v644
    %v647 = vor.u32 %v645, %v646
    %v648 = vsub.s32 4294967266, %v643
    %v649 = vadd.s32 %v648, 127
    %v650 = vshll.u32 %v649, 23
    %v651 = vor.u32 4788187, %v650
    %v652 = vand.u32 2147483647, %v651
    %v654 = vcvt.s32.f32 %v647
    %v655 = vmul.f32 %v654, %v652
    %v656 = vxor.u32 %v655, 2147483648
    %v657 = vsel %vm574, %v656, %v655
    %v658 = vsub.s32 4, %v634
    %v659 = vsel %vm574, %v658, %v634
    %v660 = vsel %vm573, %v43, %v657
    %v661 = vsel %vm573, 0, %v659
    %v662 = vcosq.f32.pop %v660
    %v663 = vsinq.f32.pop %v660
    %vm664 = vweird.f32 %v43
    %v665 = vand.u32 %v661, 3
    %vm666 = vcmp.lt.s32.totalorder %v665, 2
    %vm667 = vcmp.eq.s32.totalorder %v665, 0
    %v668 = vxor.u32 %v663, 2147483648
    %v669 = vsel %vm667, %v662, %v668
    %vm670 = vcmp.eq.s32.totalorder %v665, 2
    %v671 = vxor.u32 %v662, 2147483648
    %v672 = vsel %vm670, %v671, %v663
    %v673 = vsel %vm666, %v669, %v672
    %v674 = vsel %vm664, nan, %v673
    %v675 = vand.u32 2147483647, %v44
    %vm676 = vcmp.le.f32.partialorder %v675, 0.7853982
    %vm677 = vcmp.lt.s32.totalorder %v44, 0
    %v678 = vand.u32 %v44, 2139095040
    %v679 = vshrl.u32 %v678, 23
    %v680 = vsub.s32 %v679, 127
    %v681 = vand.u32 2147483647, %v44
    %v682 = vand.u32 %v681, 8388607
    %v683 = vor.u32 %v682, 8388608
    %v684 = vsub.s32 0, %v683
    %v685 = vadd.s32 %v680, 1
    %vm686 = vcmp.gt.s32.totalorder %v685, 0
    %v687 = vsel %vm686, %v685, 0
    %v688 = vshrl.u32 %v687, 5
    %v689 = vand.u32 %v687, 31
    %v690 = vsub.s32 32, %v689
    %v691 = vshrl.u32 683565275, %v690
    %v692 = vshll.u32 683565275, %v689
    %v693 = vshrl.u32 2475754826, %v690
    %v694 = vor.u32 %v692, %v693
    %v695 = vshll.u32 2475754826, %v689
    %v696 = vshrl.u32 2131351028, %v690
    %v697 = vor.u32 %v695, %v696
    %v698 = vshll.u32 2131351028, %v689
    %v699 = vshrl.u32 2102212464, %v690
    %v700 = vor.u32 %v698, %v699
    %v701 = vshll.u32 2102212464, %v689
    %v702 = vshrl.u32 920167782, %v690
    %v703 = vor.u32 %v701, %v702
    %v704 = vshll.u32 920167782, %v689
    %v705 = vshrl.u32 1326507024, %v690
    %v706 = vor.u32 %v704, %v705
    %vm707 = vcmp.lt.s32.totalorder %v688, 1
    %vm708 = vcmp.lt.s32.totalorder %v688, 2
    %vm709 = vcmp.lt.s32.totalorder %v688, 3
    %vm710 = vcmp.lt.s32.totalorder %v688, 4
    %v711 = vsel %vm707, %v691, %v694
    %v712 = vsel %vm710, %v700, 2102212464
    %v713 = vsel %vm709, %v697, %v712
    %v714 = vsel %vm708, %v711, %v713
    %v715 = vsel %vm707, %v694, %v697
    %v716 = vsel %vm710, %v703, 920167782
    %v717 = vsel %vm709, %v700, %v716
    %v718 = vsel %vm708, %v715, %v717
    %v719 = vsel %vm707, %v697, %v700
    %v720 = vsel %vm710, %v706, 1326507024
    %v721 = vsel %vm709, %v703, %v720
    %v722 = vsel %vm708, %v719, %v721
    %v723 = vshll.u32 %v683, 8
    %v724 = vmul.u32.u64.compose %v723, %v722
    %v725 = vextract.low.u32 %v724
    %v726 = vextract.high.u32 %v724
    %v727 = vmul.u32.u64.compose %v723, %v718
    %v728 = vextract.low.u32 %v727
    %v729 = vextract.high.u32 %v727
    %v730 = vmul.u32 %v723, %v714
    %v731 = vadd.s32 %v726, %v728
    %vm732 = vc.u32 %v726, %v728
    %v733 = vadd.s32 %v729, 1
    %v734 = vsel %vm732, %v733, %v729
    %v735 = vadd.s32 %v730, %v734
    %v736 = vadd.s32 %v735, 536870912
    %v737 = vshrl.u32 %v736, 30
    %v738 = vshll.u32 %v737, 30
    %v739 = vsub.s32 %v735, %v738
    %vm740 = vcmp.lt.s32.totalorder %v739, 0
    %v741 = vsub.s32 0, %v739
    %v742 = vsel %vm740, %v741, %v739
    %v743 = vclz %v742
    %v744 = vsub.s32 %v743, 2
    %vm745 = vcmp.gt.s32.totalorder 0, %v744
    %v746 = vsel %vm745, 0, %v744
    %v747 = vsub.s32 32, %v746
    %v748 = vshll.u32 %v739, %v746
    %v749 = vshrl.u32 %v731, %v747
    %v750 = vor.u32 %v748, %v749
    %v751 = vsub.s32 4294967266, %v746
    %v752 = vadd.s32 %v751, 127
    %v753 = vshll.u32 %v752, 23
    %v754 = vor.u32 4788187, %v753
    %v755 = vand.u32 2147483647, %v754
    %v757 = vcvt.s32.f32 %v750
    %v758 = vmul.f32 %v757, %v755
    %v759 = vxor.u32 %v758, 2147483648
    %v760 = vsel %vm677, %v759, %v758
    %v761 = vsub.s32 4, %v737
    %v762 = vsel %vm677, %v761, %v737
    %v763 = vsel %vm676, %v44, %v760
    %v764 = vsel %vm676, 0, %v762
    %v765 = vcosq.f32.pop %v763
    %v766 = vsinq.f32.pop %v763
    %vm767 = vweird.f32 %v44
    %v768 = vand.u32 %v764, 3
    %vm769 = vcmp.lt.s32.totalorder %v768, 2
    %vm770 = vcmp.eq.s32.totalorder %v768, 0
    %v771 = vxor.u32 %v766, 2147483648
    %v772 = vsel %vm770, %v765, %v771
    %vm773 = vcmp.eq.s32.totalorder %v768, 2
    %v774 = vxor.u32 %v765, 2147483648
    %v775 = vsel %vm773, %v774, %v766
    %v776 = vsel %vm769, %v772, %v775
    %v777 = vsel %vm767, nan, %v776
    %v778 = vand.u32 2147483647, %v45
    %vm779 = vcmp.le.f32.partialorder %v778, 0.7853982
    %vm780 = vcmp.lt.s32.totalorder %v45, 0
    %v781 = vand.u32 %v45, 2139095040
    %v782 = vshrl.u32 %v781, 23
    %v783 = vsub.s32 %v782, 127
    %v784 = vand.u32 2147483647, %v45
    %v785 = vand.u32 %v784, 8388607
    %v786 = vor.u32 %v785, 8388608
    %v787 = vsub.s32 0, %v786
    %v788 = vadd.s32 %v783, 1
    %vm789 = vcmp.gt.s32.totalorder %v788, 0
    %v790 = vsel %vm789, %v788, 0
    %v791 = vshrl.u32 %v790, 5
    %v792 = vand.u32 %v790, 31
    %v793 = vsub.s32 32, %v792
    %v794 = vshrl.u32 683565275, %v793
    %v795 = vshll.u32 683565275, %v792
    %v796 = vshrl.u32 2475754826, %v793
    %v797 = vor.u32 %v795, %v796
    %v798 = vshll.u32 2475754826, %v792
    %v799 = vshrl.u32 2131351028, %v793
    %v800 = vor.u32 %v798, %v799
    %v801 = vshll.u32 2131351028, %v792
    %v802 = vshrl.u32 2102212464, %v793
    %v803 = vor.u32 %v801, %v802
    %v804 = vshll.u32 2102212464, %v792
    %v805 = vshrl.u32 920167782, %v793
    %v806 = vor.u32 %v804, %v805
    %v807 = vshll.u32 920167782, %v792
    %v808 = vshrl.u32 1326507024, %v793
    %v809 = vor.u32 %v807, %v808
    %vm810 = vcmp.lt.s32.totalorder %v791, 1
    %vm811 = vcmp.lt.s32.totalorder %v791, 2
    %vm812 = vcmp.lt.s32.totalorder %v791, 3
    %vm813 = vcmp.lt.s32.totalorder %v791, 4
    %v814 = vsel %vm810, %v794, %v797
    %v815 = vsel %vm813, %v803, 2102212464
    %v816 = vsel %vm812, %v800, %v815
    %v817 = vsel %vm811, %v814, %v816
    %v818 = vsel %vm810, %v797, %v800
    %v819 = vsel %vm813, %v806, 920167782
    %v820 = vsel %vm812, %v803, %v819
    %v821 = vsel %vm811, %v818, %v820
    %v822 = vsel %vm810, %v800, %v803
    %v823 = vsel %vm813, %v809, 1326507024
    %v824 = vsel %vm812, %v806, %v823
    %v825 = vsel %vm811, %v822, %v824
    %v826 = vshll.u32 %v786, 8
    %v827 = vmul.u32.u64.compose %v826, %v825
    %v828 = vextract.low.u32 %v827
    %v829 = vextract.high.u32 %v827
    %v830 = vmul.u32.u64.compose %v826, %v821
    %v831 = vextract.low.u32 %v830
    %v832 = vextract.high.u32 %v830
    %v833 = vmul.u32 %v826, %v817
    %v834 = vadd.s32 %v829, %v831
    %vm835 = vc.u32 %v829, %v831
    %v836 = vadd.s32 %v832, 1
    %v837 = vsel %vm835, %v836, %v832
    %v838 = vadd.s32 %v833, %v837
    %v839 = vadd.s32 %v838, 536870912
    %v840 = vshrl.u32 %v839, 30
    %v841 = vshll.u32 %v840, 30
    %v842 = vsub.s32 %v838, %v841
    %vm843 = vcmp.lt.s32.totalorder %v842, 0
    %v844 = vsub.s32 0, %v842
    %v845 = vsel %vm843, %v844, %v842
    %v846 = vclz %v845
    %v847 = vsub.s32 %v846, 2
    %vm848 = vcmp.gt.s32.totalorder 0, %v847
    %v849 = vsel %vm848, 0, %v847
    %v850 = vsub.s32 32, %v849
    %v851 = vshll.u32 %v842, %v849
    %v852 = vshrl.u32 %v834, %v850
    %v853 = vor.u32 %v851, %v852
    %v854 = vsub.s32 4294967266, %v849
    %v855 = vadd.s32 %v854, 127
    %v856 = vshll.u32 %v855, 23
    %v857 = vor.u32 4788187, %v856
    %v858 = vand.u32 2147483647, %v857
    %v860 = vcvt.s32.f32 %v853
    %v861 = vmul.f32 %v860, %v858
    %v862 = vxor.u32 %v861, 2147483648
    %v863 = vsel %vm780, %v862, %v861
    %v864 = vsub.s32 4, %v840
    %v865 = vsel %vm780, %v864, %v840
    %v866 = vsel %vm779, %v45, %v863
    %v867 = vsel %vm779, 0, %v865
    %v868 = vcosq.f32.pop %v866
    %v869 = vsinq.f32.pop %v866
    %vm870 = vweird.f32 %v45
    %v871 = vand.u32 %v867, 3
    %vm872 = vcmp.lt.s32.totalorder %v871, 2
    %vm873 = vcmp.eq.s32.totalorder %v871, 0
    %v874 = vxor.u32 %v869, 2147483648
    %v875 = vsel %vm873, %v868, %v874
    %vm876 = vcmp.eq.s32.totalorder %v871, 2
    %v877 = vxor.u32 %v868, 2147483648
    %v878 = vsel %vm876, %v877, %v869
    %v879 = vsel %vm872, %v875, %v878
    %v880 = vsel %vm870, nan, %v879
    %v881 = vld [vmem:[%s1] sm:$0xff]
    %v882 = vld [vmem:[%s1 + $0x8] sm:$0xff]
    %v883 = vld [vmem:[%s1 + $0x10] sm:$0xff]
    %v884 = vld [vmem:[%s1 + $0x18] sm:$0xff]
    %v885 = vld [vmem:[%s2] sm:$0xff]
    %v886 = vld [vmem:[%s2 + $0x8] sm:$0xff]
    %v887 = vld [vmem:[%s2 + $0x10] sm:$0xff]
    %v888 = vld [vmem:[%s2 + $0x18] sm:$0xff]
    %890 = vset.pattern.permute.xlu0 0
    %891 = vperm.xlu0 %890, %v885
    %v892 = vpop.permute.xlu0 %891
    %895 = vset.pattern.permute.xlu0 0
    %896 = vperm.xlu0 %895, %v886
    %v897 = vpop.permute.xlu0 %896
    %900 = vset.pattern.permute.xlu0 0
    %901 = vperm.xlu0 %900, %v887
    %v902 = vpop.permute.xlu0 %901
    %905 = vset.pattern.permute.xlu0 0
    %906 = vperm.xlu0 %905, %v888
    %v907 = vpop.permute.xlu0 %906
    %vm909 = vcmask 130048
    %v911 = vsel %vm909, %v881, 0
    %v914 = vsel %vm909, %v882, 0
    %v917 = vsel %vm909, %v883, 0
    %v920 = vsel %vm909, %v884, 0
    %922 = vmatprep.subr.mxu0 %v466
    %923 = vmatpush1.msra.mxu0 %v465
    %924 = vmatprep.subr.mxu0 %v674
    %925 = vmatpush1.msra.mxu0 %v571
    %926 = vmatprep.subr.mxu0 0.0
    %927 = vmatpush1.msra.mxu0 0.0
    %928 = vmatprep.subr.mxu0 0.0
    %929 = vmatpush1.msra.mxu0 0.0
    %930 = vmatprep.subr.mxu0 0.0
    %931 = vmatpush1.msra.mxu0 0.0
    %932 = vmatprep.subr.mxu0 0.0
    %933 = vmatpush1.msra.mxu0 0.0
    %934 = vmatprep.subr.mxu0 0.0
    %935 = vmatpush1.msra.mxu0 0.0
    %936 = vmatprep.subr.mxu0 0.0
    %937 = vmatpush1.msra.mxu0 0.0
    %938 = vmatprep.subr.mxu0 0.0
    %939 = vmatpush1.msra.mxu0 0.0
    %940 = vmatprep.subr.mxu0 0.0
    %941 = vmatpush1.msra.mxu0 0.0
    %942 = vmatprep.subr.mxu0 0.0
    %943 = vmatpush1.msra.mxu0 0.0
    %944 = vmatprep.subr.mxu0 0.0
    %945 = vmatpush1.msra.mxu0 0.0
    %946 = vmatprep.subr.mxu0 0.0
    %947 = vmatpush1.msra.mxu0 0.0
    %948 = vmatprep.subr.mxu0 0.0
    %949 = vmatpush1.msra.mxu0 0.0
    %950 = vmatprep.subr.mxu0 0.0
    %951 = vmatpush1.msra.mxu0 0.0
    %952 = vmatprep.subr.mxu0 0.0
    %953 = vmatpush1.msra.mxu0 0.0
    %954 = vmatprep.subr.mxu0 0.0
    %955 = vmatpush1.msra.mxu0 0.0
    %956 = vmatprep.subr.mxu0 0.0
    %957 = vmatpush1.msra.mxu0 0.0
    %958 = vmatprep.subr.mxu0 0.0
    %959 = vmatpush1.msra.mxu0 0.0
    %960 = vmatprep.subr.mxu0 0.0
    %961 = vmatpush1.msra.mxu0 0.0
    %962 = vmatprep.subr.mxu0 0.0
    %963 = vmatpush1.msra.mxu0 0.0
    %964 = vmatprep.subr.mxu0 0.0
    %965 = vmatpush1.msra.mxu0 0.0
    %966 = vmatprep.subr.mxu0 0.0
    %967 = vmatpush1.msra.mxu0 0.0
    %968 = vmatprep.subr.mxu0 0.0
    %969 = vmatpush1.msra.mxu0 0.0
    %970 = vmatprep.subr.mxu0 0.0
    %971 = vmatpush1.msra.mxu0 0.0
    %972 = vmatprep.subr.mxu0 0.0
    %973 = vmatpush1.msra.mxu0 0.0
    %974 = vmatprep.subr.mxu0 0.0
    %975 = vmatpush1.msra.mxu0 0.0
    %976 = vmatprep.subr.mxu0 0.0
    %977 = vmatpush1.msra.mxu0 0.0
    %978 = vmatprep.subr.mxu0 0.0
    %979 = vmatpush1.msra.mxu0 0.0
    %980 = vmatprep.subr.mxu0 0.0
    %981 = vmatpush1.msra.mxu0 0.0
    %982 = vmatprep.subr.mxu0 0.0
    %983 = vmatpush1.msra.mxu0 0.0
    %984 = vmatprep.subr.mxu0 0.0
    %985 = vmatpush1.msra.mxu0 0.0
    %986 = vmatprep.mubr.f32.mxu0 0.0
    %987 = vmatmul.mubr.f32.gmra.mrb[0].mxu0 %v911
    %v988 = vpop.f32.mrb[0].mxu0
    %v989 = vadd.f32 %v892, %v988
    %v990 = vpop.f32.mrb[0].mxu0
    %v991 = vadd.f32 %v892, %v990
    %992 = vmatprep.mubr.f32.mxu0 0.0
    %993 = vmatmul.mubr.f32.gmra.mrb[0].mxu0 %v914
    %v994 = vpop.f32.mrb[0].mxu0
    %v995 = vadd.f32 %v897, %v994
    %v996 = vpop.f32.mrb[0].mxu0
    %v997 = vadd.f32 %v897, %v996
    %998 = vmatprep.mubr.f32.mxu0 0.0
    %999 = vmatmul.mubr.f32.gmra.mrb[0].mxu0 %v917
    %v1000 = vpop.f32.mrb[0].mxu0
    %v1001 = vadd.f32 %v902, %v1000
    %v1002 = vpop.f32.mrb[0].mxu0
    %v1003 = vadd.f32 %v902, %v1002
    %1004 = vmatprep.mubr.f32.mxu0 0.0
    %1005 = vmatmul.mubr.f32.gmra.mrb[0].mxu0 %v920
    %v1006 = vpop.f32.mrb[0].mxu0
    %v1007 = vadd.f32 %v907, %v1006
    %v1008 = vpop.f32.mrb[0].mxu0
    %v1009 = vadd.f32 %v907, %v1008
    %1010 = vdwg.mxu0
    %1011 = vmatprep.subr.mxu0 %v468
    %1012 = vmatpush1.msra.mxu0 %v467
    %1013 = vmatprep.subr.mxu0 %v880
    %1014 = vmatpush1.msra.mxu0 %v777
    %1015 = vmatprep.subr.mxu0 0.0
    %1016 = vmatpush1.msra.mxu0 0.0
    %1017 = vmatprep.subr.mxu0 0.0
    %1018 = vmatpush1.msra.mxu0 0.0
    %1019 = vmatprep.subr.mxu0 0.0
    %1020 = vmatpush1.msra.mxu0 0.0
    %1021 = vmatprep.subr.mxu0 0.0
    %1022 = vmatpush1.msra.mxu0 0.0
    %1023 = vmatprep.subr.mxu0 0.0
    %1024 = vmatpush1.msra.mxu0 0.0
    %1025 = vmatprep.subr.mxu0 0.0
    %1026 = vmatpush1.msra.mxu0 0.0
    %1027 = vmatprep.subr.mxu0 0.0
    %1028 = vmatpush1.msra.mxu0 0.0
    %1029 = vmatprep.subr.mxu0 0.0
    %1030 = vmatpush1.msra.mxu0 0.0
    %1031 = vmatprep.subr.mxu0 0.0
    %1032 = vmatpush1.msra.mxu0 0.0
    %1033 = vmatprep.subr.mxu0 0.0
    %1034 = vmatpush1.msra.mxu0 0.0
    %1035 = vmatprep.subr.mxu0 0.0
    %1036 = vmatpush1.msra.mxu0 0.0
    %1037 = vmatprep.subr.mxu0 0.0
    %1038 = vmatpush1.msra.mxu0 0.0
    %1039 = vmatprep.subr.mxu0 0.0
    %1040 = vmatpush1.msra.mxu0 0.0
    %1041 = vmatprep.subr.mxu0 0.0
    %1042 = vmatpush1.msra.mxu0 0.0
    %1043 = vmatprep.subr.mxu0 0.0
    %1044 = vmatpush1.msra.mxu0 0.0
    %1045 = vmatprep.subr.mxu0 0.0
    %1046 = vmatpush1.msra.mxu0 0.0
    %1047 = vmatprep.subr.mxu0 0.0
    %1048 = vmatpush1.msra.mxu0 0.0
    %1049 = vmatprep.subr.mxu0 0.0
    %1050 = vmatpush1.msra.mxu0 0.0
    %1051 = vmatprep.subr.mxu0 0.0
    %1052 = vmatpush1.msra.mxu0 0.0
    %1053 = vmatprep.subr.mxu0 0.0
    %1054 = vmatpush1.msra.mxu0 0.0
    %1055 = vmatprep.subr.mxu0 0.0
    %1056 = vmatpush1.msra.mxu0 0.0
    %1057 = vmatprep.subr.mxu0 0.0
    %1058 = vmatpush1.msra.mxu0 0.0
    %1059 = vmatprep.subr.mxu0 0.0
    %1060 = vmatpush1.msra.mxu0 0.0
    %1061 = vmatprep.subr.mxu0 0.0
    %1062 = vmatpush1.msra.mxu0 0.0
    %1063 = vmatprep.subr.mxu0 0.0
    %1064 = vmatpush1.msra.mxu0 0.0
    %1065 = vmatprep.subr.mxu0 0.0
    %1066 = vmatpush1.msra.mxu0 0.0
    %1067 = vmatprep.subr.mxu0 0.0
    %1068 = vmatpush1.msra.mxu0 0.0
    %1069 = vmatprep.subr.mxu0 0.0
    %1070 = vmatpush1.msra.mxu0 0.0
    %1071 = vmatprep.subr.mxu0 0.0
    %1072 = vmatpush1.msra.mxu0 0.0
    %1073 = vmatprep.subr.mxu0 0.0
    %1074 = vmatpush1.msra.mxu0 0.0
    %1075 = vmatprep.mubr.f32.mxu0 0.0
    %1076 = vmatmul.mubr.f32.gmra.mrb[0].mxu0 %v911
    %v1077 = vpop.f32.mrb[0].mxu0
    %v1078 = vadd.f32 %v892, %v1077
    %v1079 = vpop.f32.mrb[0].mxu0
    %v1080 = vadd.f32 %v892, %v1079
    %1081 = vmatprep.mubr.f32.mxu0 0.0
    %1082 = vmatmul.mubr.f32.gmra.mrb[0].mxu0 %v914
    %v1083 = vpop.f32.mrb[0].mxu0
    %v1084 = vadd.f32 %v897, %v1083
    %v1085 = vpop.f32.mrb[0].mxu0
    %v1086 = vadd.f32 %v897, %v1085
    %1087 = vmatprep.mubr.f32.mxu0 0.0
    %1088 = vmatmul.mubr.f32.gmra.mrb[0].mxu0 %v917
    %v1089 = vpop.f32.mrb[0].mxu0
    %v1090 = vadd.f32 %v902, %v1089
    %v1091 = vpop.f32.mrb[0].mxu0
    %v1092 = vadd.f32 %v902, %v1091
    %1093 = vmatprep.mubr.f32.mxu0 0.0
    %1094 = vmatmul.mubr.f32.gmra.mrb[0].mxu0 %v920
    %v1095 = vpop.f32.mrb[0].mxu0
    %v1096 = vadd.f32 %v907, %v1095
    %v1097 = vpop.f32.mrb[0].mxu0
    %v1098 = vadd.f32 %v907, %v1097
    %1099 = vdwg.mxu0
    %v1100 = vmax.f32 %v989, 0.0
    %v1101 = vmax.f32 %v991, 0.0
    %v1102 = vmax.f32 %v1078, 0.0
    %v1103 = vmax.f32 %v1080, 0.0
    %v1104 = vmax.f32 %v995, 0.0
    %v1105 = vmax.f32 %v997, 0.0
    %v1106 = vmax.f32 %v1084, 0.0
    %v1107 = vmax.f32 %v1086, 0.0
    %v1108 = vmax.f32 %v1001, 0.0
    %v1109 = vmax.f32 %v1003, 0.0
    %v1110 = vmax.f32 %v1090, 0.0
    %v1111 = vmax.f32 %v1092, 0.0
    %v1112 = vmax.f32 %v1007, 0.0
    %v1113 = vmax.f32 %v1009, 0.0
    %v1114 = vmax.f32 %v1096, 0.0
    %v1115 = vmax.f32 %v1098, 0.0
    %v1116 = vld [vmem:[%s3] sm:$0xff]
    %v1117 = vld [vmem:[%s3 + $0x8] sm:$0xff]
    %v1118 = vld [vmem:[%s3 + $0x10] sm:$0xff]
    %v1119 = vld [vmem:[%s3 + $0x18] sm:$0xff]
    %v1120 = vld [vmem:[%s4] sm:$0xff]
    %v1121 = vld [vmem:[%s4 + $0x8] sm:$0xff]
    %v1122 = vld [vmem:[%s4 + $0x10] sm:$0xff]
    %v1123 = vld [vmem:[%s4 + $0x18] sm:$0xff]
    %1125 = vset.pattern.permute.xlu0 0
    %1126 = vperm.xlu0 %1125, %v1120
    %v1127 = vpop.permute.xlu0 %1126
    %1130 = vset.pattern.permute.xlu0 0
    %1131 = vperm.xlu0 %1130, %v1121
    %v1132 = vpop.permute.xlu0 %1131
    %1135 = vset.pattern.permute.xlu0 0
    %1136 = vperm.xlu0 %1135, %v1122
    %v1137 = vpop.permute.xlu0 %1136
    %1140 = vset.pattern.permute.xlu0 0
    %1141 = vperm.xlu0 %1140, %v1123
    %v1142 = vpop.permute.xlu0 %1141
    %vm1144 = vcmask 261120
    %v1146 = vsel %vm1144, %v1116, 0
    %v1149 = vsel %vm1144, %v1117, 0
    %v1152 = vsel %vm1144, %v1118, 0
    %v1155 = vsel %vm1144, %v1119, 0
    %1157 = vmatprep.subr.mxu0 %v1101
    %1158 = vmatpush1.msra.mxu0 %v1100
    %1159 = vmatprep.subr.mxu0 %v1105
    %1160 = vmatpush1.msra.mxu0 %v1104
    %1161 = vmatprep.subr.mxu0 %v1109
    %1162 = vmatpush1.msra.mxu0 %v1108
    %1163 = vmatprep.subr.mxu0 %v1113
    %1164 = vmatpush1.msra.mxu0 %v1112
    %1165 = vmatprep.subr.mxu0 0.0
    %1166 = vmatpush1.msra.mxu0 0.0
    %1167 = vmatprep.subr.mxu0 0.0
    %1168 = vmatpush1.msra.mxu0 0.0
    %1169 = vmatprep.subr.mxu0 0.0
    %1170 = vmatpush1.msra.mxu0 0.0
    %1171 = vmatprep.subr.mxu0 0.0
    %1172 = vmatpush1.msra.mxu0 0.0
    %1173 = vmatprep.subr.mxu0 0.0
    %1174 = vmatpush1.msra.mxu0 0.0
    %1175 = vmatprep.subr.mxu0 0.0
    %1176 = vmatpush1.msra.mxu0 0.0
    %1177 = vmatprep.subr.mxu0 0.0
    %1178 = vmatpush1.msra.mxu0 0.0
    %1179 = vmatprep.subr.mxu0 0.0
    %1180 = vmatpush1.msra.mxu0 0.0
    %1181 = vmatprep.subr.mxu0 0.0
    %1182 = vmatpush1.msra.mxu0 0.0
    %1183 = vmatprep.subr.mxu0 0.0
    %1184 = vmatpush1.msra.mxu0 0.0
    %1185 = vmatprep.subr.mxu0 0.0
    %1186 = vmatpush1.msra.mxu0 0.0
    %1187 = vmatprep.subr.mxu0 0.0
    %1188 = vmatpush1.msra.mxu0 0.0
    %1189 = vmatprep.subr.mxu0 0.0
    %1190 = vmatpush1.msra.mxu0 0.0
    %1191 = vmatprep.subr.mxu0 0.0
    %1192 = vmatpush1.msra.mxu0 0.0
    %1193 = vmatprep.subr.mxu0 0.0
    %1194 = vmatpush1.msra.mxu0 0.0
    %1195 = vmatprep.subr.mxu0 0.0
    %1196 = vmatpush1.msra.mxu0 0.0
    %1197 = vmatprep.subr.mxu0 0.0
    %1198 = vmatpush1.msra.mxu0 0.0
    %1199 = vmatprep.subr.mxu0 0.0
    %1200 = vmatpush1.msra.mxu0 0.0
    %1201 = vmatprep.subr.mxu0 0.0
    %1202 = vmatpush1.msra.mxu0 0.0
    %1203 = vmatprep.subr.mxu0 0.0
    %1204 = vmatpush1.msra.mxu0 0.0
    %1205 = vmatprep.subr.mxu0 0.0
    %1206 = vmatpush1.msra.mxu0 0.0
    %1207 = vmatprep.subr.mxu0 0.0
    %1208 = vmatpush1.msra.mxu0 0.0
    %1209 = vmatprep.subr.mxu0 0.0
    %1210 = vmatpush1.msra.mxu0 0.0
    %1211 = vmatprep.subr.mxu0 0.0
    %1212 = vmatpush1.msra.mxu0 0.0
    %1213 = vmatprep.subr.mxu0 0.0
    %1214 = vmatpush1.msra.mxu0 0.0
    %1215 = vmatprep.subr.mxu0 0.0
    %1216 = vmatpush1.msra.mxu0 0.0
    %1217 = vmatprep.subr.mxu0 0.0
    %1218 = vmatpush1.msra.mxu0 0.0
    %1219 = vmatprep.subr.mxu0 0.0
    %1220 = vmatpush1.msra.mxu0 0.0
    %1221 = vmatprep.mubr.f32.mxu0 0.0
    %1222 = vmatmul.mubr.f32.gmra.mrb[0].mxu0 %v1146
    %v1223 = vpop.f32.mrb[0].mxu0
    %v1224 = vadd.f32 %v1127, %v1223
    %v1225 = vpop.f32.mrb[0].mxu0
    %v1226 = vadd.f32 %v1127, %v1225
    %1227 = vmatprep.mubr.f32.mxu0 0.0
    %1228 = vmatmul.mubr.f32.gmra.mrb[0].mxu0 %v1149
    %v1229 = vpop.f32.mrb[0].mxu0
    %v1230 = vadd.f32 %v1132, %v1229
    %v1231 = vpop.f32.mrb[0].mxu0
    %v1232 = vadd.f32 %v1132, %v1231
    %1233 = vmatprep.mubr.f32.mxu0 0.0
    %1234 = vmatmul.mubr.f32.gmra.mrb[0].mxu0 %v1152
    %v1235 = vpop.f32.mrb[0].mxu0
    %v1236 = vadd.f32 %v1137, %v1235
    %v1237 = vpop.f32.mrb[0].mxu0
    %v1238 = vadd.f32 %v1137, %v1237
    %1239 = vmatprep.mubr.f32.mxu0 0.0
    %1240 = vmatmul.mubr.f32.gmra.mrb[0].mxu0 %v1155
    %v1241 = vpop.f32.mrb[0].mxu0
    %v1242 = vadd.f32 %v1142, %v1241
    %v1243 = vpop.f32.mrb[0].mxu0
    %v1244 = vadd.f32 %v1142, %v1243
    %1245 = vdwg.mxu0
    %1246 = vmatprep.subr.mxu0 %v1103
    %1247 = vmatpush1.msra.mxu0 %v1102
    %1248 = vmatprep.subr.mxu0 %v1107
    %1249 = vmatpush1.msra.mxu0 %v1106
    %1250 = vmatprep.subr.mxu0 %v1111
    %1251 = vmatpush1.msra.mxu0 %v1110
    %1252 = vmatprep.subr.mxu0 %v1115
    %1253 = vmatpush1.msra.mxu0 %v1114
    %1254 = vmatprep.subr.mxu0 0.0
    %1255 = vmatpush1.msra.mxu0 0.0
    %1256 = vmatprep.subr.mxu0 0.0
    %1257 = vmatpush1.msra.mxu0 0.0
    %1258 = vmatprep.subr.mxu0 0.0
    %1259 = vmatpush1.msra.mxu0 0.0
    %1260 = vmatprep.subr.mxu0 0.0
    %1261 = vmatpush1.msra.mxu0 0.0
    %1262 = vmatprep.subr.mxu0 0.0
    %1263 = vmatpush1.msra.mxu0 0.0
    %1264 = vmatprep.subr.mxu0 0.0
    %1265 = vmatpush1.msra.mxu0 0.0
    %1266 = vmatprep.subr.mxu0 0.0
    %1267 = vmatpush1.msra.mxu0 0.0
    %1268 = vmatprep.subr.mxu0 0.0
    %1269 = vmatpush1.msra.mxu0 0.0
    %1270 = vmatprep.subr.mxu0 0.0
    %1271 = vmatpush1.msra.mxu0 0.0
    %1272 = vmatprep.subr.mxu0 0.0
    %1273 = vmatpush1.msra.mxu0 0.0
    %1274 = vmatprep.subr.mxu0 0.0
    %1275 = vmatpush1.msra.mxu0 0.0
    %1276 = vmatprep.subr.mxu0 0.0
    %1277 = vmatpush1.msra.mxu0 0.0
    %1278 = vmatprep.subr.mxu0 0.0
    %1279 = vmatpush1.msra.mxu0 0.0
    %1280 = vmatprep.subr.mxu0 0.0
    %1281 = vmatpush1.msra.mxu0 0.0
    %1282 = vmatprep.subr.mxu0 0.0
    %1283 = vmatpush1.msra.mxu0 0.0
    %1284 = vmatprep.subr.mxu0 0.0
    %1285 = vmatpush1.msra.mxu0 0.0
    %1286 = vmatprep.subr.mxu0 0.0
    %1287 = vmatpush1.msra.mxu0 0.0
    %1288 = vmatprep.subr.mxu0 0.0
    %1289 = vmatpush1.msra.mxu0 0.0
    %1290 = vmatprep.subr.mxu0 0.0
    %1291 = vmatpush1.msra.mxu0 0.0
    %1292 = vmatprep.subr.mxu0 0.0
    %1293 = vmatpush1.msra.mxu0 0.0
    %1294 = vmatprep.subr.mxu0 0.0
    %1295 = vmatpush1.msra.mxu0 0.0
    %1296 = vmatprep.subr.mxu0 0.0
    %1297 = vmatpush1.msra.mxu0 0.0
    %1298 = vmatprep.subr.mxu0 0.0
    %1299 = vmatpush1.msra.mxu0 0.0
    %1300 = vmatprep.subr.mxu0 0.0
    %1301 = vmatpush1.msra.mxu0 0.0
    %1302 = vmatprep.subr.mxu0 0.0
    %1303 = vmatpush1.msra.mxu0 0.0
    %1304 = vmatprep.subr.mxu0 0.0
    %1305 = vmatpush1.msra.mxu0 0.0
    %1306 = vmatprep.subr.mxu0 0.0
    %1307 = vmatpush1.msra.mxu0 0.0
    %1308 = vmatprep.subr.mxu0 0.0
    %1309 = vmatpush1.msra.mxu0 0.0
    %1310 = vmatprep.mubr.f32.mxu0 0.0
    %1311 = vmatmul.mubr.f32.gmra.mrb[0].mxu0 %v1146
    %v1312 = vpop.f32.mrb[0].mxu0
    %v1313 = vadd.f32 %v1127, %v1312
    %v1314 = vpop.f32.mrb[0].mxu0
    %v1315 = vadd.f32 %v1127, %v1314
    %1316 = vmatprep.mubr.f32.mxu0 0.0
    %1317 = vmatmul.mubr.f32.gmra.mrb[0].mxu0 %v1149
    %v1318 = vpop.f32.mrb[0].mxu0
    %v1319 = vadd.f32 %v1132, %v1318
    %v1320 = vpop.f32.mrb[0].mxu0
    %v1321 = vadd.f32 %v1132, %v1320
    %1322 = vmatprep.mubr.f32.mxu0 0.0
    %1323 = vmatmul.mubr.f32.gmra.mrb[0].mxu0 %v1152
    %v1324 = vpop.f32.mrb[0].mxu0
    %v1325 = vadd.f32 %v1137, %v1324
    %v1326 = vpop.f32.mrb[0].mxu0
    %v1327 = vadd.f32 %v1137, %v1326
    %1328 = vmatprep.mubr.f32.mxu0 0.0
    %1329 = vmatmul.mubr.f32.gmra.mrb[0].mxu0 %v1155
    %v1330 = vpop.f32.mrb[0].mxu0
    %v1331 = vadd.f32 %v1142, %v1330
    %v1332 = vpop.f32.mrb[0].mxu0
    %v1333 = vadd.f32 %v1142, %v1332
    %1334 = vdwg.mxu0
    %v1335 = vmax.f32 %v1224, 0.0
    %v1336 = vmax.f32 %v1226, 0.0
    %v1337 = vmax.f32 %v1313, 0.0
    %v1338 = vmax.f32 %v1315, 0.0
    %v1339 = vmax.f32 %v1230, 0.0
    %v1340 = vmax.f32 %v1232, 0.0
    %v1341 = vmax.f32 %v1319, 0.0
    %v1342 = vmax.f32 %v1321, 0.0
    %v1343 = vmax.f32 %v1236, 0.0
    %v1344 = vmax.f32 %v1238, 0.0
    %v1345 = vmax.f32 %v1325, 0.0
    %v1346 = vmax.f32 %v1327, 0.0
    %v1347 = vmax.f32 %v1242, 0.0
    %v1348 = vmax.f32 %v1244, 0.0
    %v1349 = vmax.f32 %v1331, 0.0
    %v1350 = vmax.f32 %v1333, 0.0
    %v1351 = vld [vmem:[%s5] sm:$0xff]
    %v1352 = vld [vmem:[%s5 + $0x8] sm:$0xff]
    %v1353 = vld [vmem:[%s5 + $0x10] sm:$0xff]
    %v1354 = vld [vmem:[%s5 + $0x18] sm:$0xff]
    %v1355 = vld [vmem:[%s6] sm:$0xff]
    %v1356 = vld [vmem:[%s6 + $0x8] sm:$0xff]
    %v1357 = vld [vmem:[%s6 + $0x10] sm:$0xff]
    %v1358 = vld [vmem:[%s6 + $0x18] sm:$0xff]
    %v1360 = vsel %vm909, %v1355, 0
    %v1363 = vsel %vm909, %v1356, 0
    %v1366 = vsel %vm909, %v1357, 0
    %v1369 = vsel %vm909, %v1358, 0
    %1371 = vmatprep.subr.mxu0 %v466
    %1372 = vmatpush1.msra.mxu0 %v465
    %1373 = vmatprep.subr.mxu0 %v674
    %1374 = vmatpush1.msra.mxu0 %v571
    %1375 = vmatprep.subr.mxu0 0.0
    %1376 = vmatpush1.msra.mxu0 0.0
    %1377 = vmatprep.subr.mxu0 0.0
    %1378 = vmatpush1.msra.mxu0 0.0
    %1379 = vmatprep.subr.mxu0 0.0
    %1380 = vmatpush1.msra.mxu0 0.0
    %1381 = vmatprep.subr.mxu0 0.0
    %1382 = vmatpush1.msra.mxu0 0.0
    %1383 = vmatprep.subr.mxu0 0.0
    %1384 = vmatpush1.msra.mxu0 0.0
    %1385 = vmatprep.subr.mxu0 0.0
    %1386 = vmatpush1.msra.mxu0 0.0
    %1387 = vmatprep.subr.mxu0 0.0
    %1388 = vmatpush1.msra.mxu0 0.0
    %1389 = vmatprep.subr.mxu0 0.0
    %1390 = vmatpush1.msra.mxu0 0.0
    %1391 = vmatprep.subr.mxu0 0.0
    %1392 = vmatpush1.msra.mxu0 0.0
    %1393 = vmatprep.subr.mxu0 0.0
    %1394 = vmatpush1.msra.mxu0 0.0
    %1395 = vmatprep.subr.mxu0 0.0
    %1396 = vmatpush1.msra.mxu0 0.0
    %1397 = vmatprep.subr.mxu0 0.0
    %1398 = vmatpush1.msra.mxu0 0.0
    %1399 = vmatprep.subr.mxu0 0.0
    %1400 = vmatpush1.msra.mxu0 0.0
    %1401 = vmatprep.subr.mxu0 0.0
    %1402 = vmatpush1.msra.mxu0 0.0
    %1403 = vmatprep.subr.mxu0 0.0
    %1404 = vmatpush1.msra.mxu0 0.0
    %1405 = vmatprep.subr.mxu0 0.0
    %1406 = vmatpush1.msra.mxu0 0.0
    %1407 = vmatprep.subr.mxu0 0.0
    %1408 = vmatpush1.msra.mxu0 0.0
    %1409 = vmatprep.subr.mxu0 0.0
    %1410 = vmatpush1.msra.mxu0 0.0
    %1411 = vmatprep.subr.mxu0 0.0
    %1412 = vmatpush1.msra.mxu0 0.0
    %1413 = vmatprep.subr.mxu0 0.0
    %1414 = vmatpush1.msra.mxu0 0.0
    %1415 = vmatprep.subr.mxu0 0.0
    %1416 = vmatpush1.msra.mxu0 0.0
    %1417 = vmatprep.subr.mxu0 0.0
    %1418 = vmatpush1.msra.mxu0 0.0
    %1419 = vmatprep.subr.mxu0 0.0
    %1420 = vmatpush1.msra.mxu0 0.0
    %1421 = vmatprep.subr.mxu0 0.0
    %1422 = vmatpush1.msra.mxu0 0.0
    %1423 = vmatprep.subr.mxu0 0.0
    %1424 = vmatpush1.msra.mxu0 0.0
    %1425 = vmatprep.subr.mxu0 0.0
    %1426 = vmatpush1.msra.mxu0 0.0
    %1427 = vmatprep.subr.mxu0 0.0
    %1428 = vmatpush1.msra.mxu0 0.0
    %1429 = vmatprep.subr.mxu0 0.0
    %1430 = vmatpush1.msra.mxu0 0.0
    %1431 = vmatprep.subr.mxu0 0.0
    %1432 = vmatpush1.msra.mxu0 0.0
    %1433 = vmatprep.subr.mxu0 0.0
    %1434 = vmatpush1.msra.mxu0 0.0
    %1435 = vmatprep.mubr.f32.mxu0 0.0
    %1436 = vmatmul.mubr.f32.gmra.mrb[0].mxu0 %v1360
    %v1437 = vpop.f32.mrb[0].mxu0
    %v1438 = vadd.f32 0.0, %v1437
    %v1439 = vpop.f32.mrb[0].mxu0
    %v1440 = vadd.f32 0.0, %v1439
    %1441 = vmatprep.mubr.f32.mxu0 0.0
    %1442 = vmatmul.mubr.f32.gmra.mrb[0].mxu0 %v1363
    %v1443 = vpop.f32.mrb[0].mxu0
    %v1444 = vadd.f32 0.0, %v1443
    %v1445 = vpop.f32.mrb[0].mxu0
    %v1446 = vadd.f32 0.0, %v1445
    %1447 = vmatprep.mubr.f32.mxu0 0.0
    %1448 = vmatmul.mubr.f32.gmra.mrb[0].mxu0 %v1366
    %v1449 = vpop.f32.mrb[0].mxu0
    %v1450 = vadd.f32 0.0, %v1449
    %v1451 = vpop.f32.mrb[0].mxu0
    %v1452 = vadd.f32 0.0, %v1451
    %1453 = vmatprep.mubr.f32.mxu0 0.0
    %1454 = vmatmul.mubr.f32.gmra.mrb[0].mxu0 %v1369
    %v1455 = vpop.f32.mrb[0].mxu0
    %v1456 = vadd.f32 0.0, %v1455
    %v1457 = vpop.f32.mrb[0].mxu0
    %v1458 = vadd.f32 0.0, %v1457
    %1459 = vdwg.mxu0
    %1460 = vmatprep.subr.mxu0 %v468
    %1461 = vmatpush1.msra.mxu0 %v467
    %1462 = vmatprep.subr.mxu0 %v880
    %1463 = vmatpush1.msra.mxu0 %v777
    %1464 = vmatprep.subr.mxu0 0.0
    %1465 = vmatpush1.msra.mxu0 0.0
    %1466 = vmatprep.subr.mxu0 0.0
    %1467 = vmatpush1.msra.mxu0 0.0
    %1468 = vmatprep.subr.mxu0 0.0
    %1469 = vmatpush1.msra.mxu0 0.0
    %1470 = vmatprep.subr.mxu0 0.0
    %1471 = vmatpush1.msra.mxu0 0.0
    %1472 = vmatprep.subr.mxu0 0.0
    %1473 = vmatpush1.msra.mxu0 0.0
    %1474 = vmatprep.subr.mxu0 0.0
    %1475 = vmatpush1.msra.mxu0 0.0
    %1476 = vmatprep.subr.mxu0 0.0
    %1477 = vmatpush1.msra.mxu0 0.0
    %1478 = vmatprep.subr.mxu0 0.0
    %1479 = vmatpush1.msra.mxu0 0.0
    %1480 = vmatprep.subr.mxu0 0.0
    %1481 = vmatpush1.msra.mxu0 0.0
    %1482 = vmatprep.subr.mxu0 0.0
    %1483 = vmatpush1.msra.mxu0 0.0
    %1484 = vmatprep.subr.mxu0 0.0
    %1485 = vmatpush1.msra.mxu0 0.0
    %1486 = vmatprep.subr.mxu0 0.0
    %1487 = vmatpush1.msra.mxu0 0.0
    %1488 = vmatprep.subr.mxu0 0.0
    %1489 = vmatpush1.msra.mxu0 0.0
    %1490 = vmatprep.subr.mxu0 0.0
    %1491 = vmatpush1.msra.mxu0 0.0
    %1492 = vmatprep.subr.mxu0 0.0
    %1493 = vmatpush1.msra.mxu0 0.0
    %1494 = vmatprep.subr.mxu0 0.0
    %1495 = vmatpush1.msra.mxu0 0.0
    %1496 = vmatprep.subr.mxu0 0.0
    %1497 = vmatpush1.msra.mxu0 0.0
    %1498 = vmatprep.subr.mxu0 0.0
    %1499 = vmatpush1.msra.mxu0 0.0
    %1500 = vmatprep.subr.mxu0 0.0
    %1501 = vmatpush1.msra.mxu0 0.0
    %1502 = vmatprep.subr.mxu0 0.0
    %1503 = vmatpush1.msra.mxu0 0.0
    %1504 = vmatprep.subr.mxu0 0.0
    %1505 = vmatpush1.msra.mxu0 0.0
    %1506 = vmatprep.subr.mxu0 0.0
    %1507 = vmatpush1.msra.mxu0 0.0
    %1508 = vmatprep.subr.mxu0 0.0
    %1509 = vmatpush1.msra.mxu0 0.0
    %1510 = vmatprep.subr.mxu0 0.0
    %1511 = vmatpush1.msra.mxu0 0.0
    %1512 = vmatprep.subr.mxu0 0.0
    %1513 = vmatpush1.msra.mxu0 0.0
    %1514 = vmatprep.subr.mxu0 0.0
    %1515 = vmatpush1.msra.mxu0 0.0
    %1516 = vmatprep.subr.mxu0 0.0
    %1517 = vmatpush1.msra.mxu0 0.0
    %1518 = vmatprep.subr.mxu0 0.0
    %1519 = vmatpush1.msra.mxu0 0.0
    %1520 = vmatprep.subr.mxu0 0.0
    %1521 = vmatpush1.msra.mxu0 0.0
    %1522 = vmatprep.subr.mxu0 0.0
    %1523 = vmatpush1.msra.mxu0 0.0
    %1524 = vmatprep.mubr.f32.mxu0 0.0
    %1525 = vmatmul.mubr.f32.gmra.mrb[0].mxu0 %v1360
    %v1526 = vpop.f32.mrb[0].mxu0
    %v1527 = vadd.f32 0.0, %v1526
    %v1528 = vpop.f32.mrb[0].mxu0
    %v1529 = vadd.f32 0.0, %v1528
    %1530 = vmatprep.mubr.f32.mxu0 0.0
    %1531 = vmatmul.mubr.f32.gmra.mrb[0].mxu0 %v1363
    %v1532 = vpop.f32.mrb[0].mxu0
    %v1533 = vadd.f32 0.0, %v1532
    %v1534 = vpop.f32.mrb[0].mxu0
    %v1535 = vadd.f32 0.0, %v1534
    %1536 = vmatprep.mubr.f32.mxu0 0.0
    %1537 = vmatmul.mubr.f32.gmra.mrb[0].mxu0 %v1366
    %v1538 = vpop.f32.mrb[0].mxu0
    %v1539 = vadd.f32 0.0, %v1538
    %v1540 = vpop.f32.mrb[0].mxu0
    %v1541 = vadd.f32 0.0, %v1540
    %1542 = vmatprep.mubr.f32.mxu0 0.0
    %1543 = vmatmul.mubr.f32.gmra.mrb[0].mxu0 %v1369
    %v1544 = vpop.f32.mrb[0].mxu0
    %v1545 = vadd.f32 0.0, %v1544
    %v1546 = vpop.f32.mrb[0].mxu0
    %v1547 = vadd.f32 0.0, %v1546
    %1548 = vdwg.mxu0
    %v1550 = vsel %vm1144, %v1351, 0
    %v1553 = vsel %vm1144, %v1352, 0
    %v1556 = vsel %vm1144, %v1353, 0
    %v1559 = vsel %vm1144, %v1354, 0
    %1561 = vmatprep.subr.mxu0 %v1336
    %1562 = vmatpush1.msra.mxu0 %v1335
    %1563 = vmatprep.subr.mxu0 %v1340
    %1564 = vmatpush1.msra.mxu0 %v1339
    %1565 = vmatprep.subr.mxu0 %v1344
    %1566 = vmatpush1.msra.mxu0 %v1343
    %1567 = vmatprep.subr.mxu0 %v1348
    %1568 = vmatpush1.msra.mxu0 %v1347
    %1569 = vmatprep.subr.mxu0 0.0
    %1570 = vmatpush1.msra.mxu0 0.0
    %1571 = vmatprep.subr.mxu0 0.0
    %1572 = vmatpush1.msra.mxu0 0.0
    %1573 = vmatprep.subr.mxu0 0.0
    %1574 = vmatpush1.msra.mxu0 0.0
    %1575 = vmatprep.subr.mxu0 0.0
    %1576 = vmatpush1.msra.mxu0 0.0
    %1577 = vmatprep.subr.mxu0 0.0
    %1578 = vmatpush1.msra.mxu0 0.0
    %1579 = vmatprep.subr.mxu0 0.0
    %1580 = vmatpush1.msra.mxu0 0.0
    %1581 = vmatprep.subr.mxu0 0.0
    %1582 = vmatpush1.msra.mxu0 0.0
    %1583 = vmatprep.subr.mxu0 0.0
    %1584 = vmatpush1.msra.mxu0 0.0
    %1585 = vmatprep.subr.mxu0 0.0
    %1586 = vmatpush1.msra.mxu0 0.0
    %1587 = vmatprep.subr.mxu0 0.0
    %1588 = vmatpush1.msra.mxu0 0.0
    %1589 = vmatprep.subr.mxu0 0.0
    %1590 = vmatpush1.msra.mxu0 0.0
    %1591 = vmatprep.subr.mxu0 0.0
    %1592 = vmatpush1.msra.mxu0 0.0
    %1593 = vmatprep.subr.mxu0 0.0
    %1594 = vmatpush1.msra.mxu0 0.0
    %1595 = vmatprep.subr.mxu0 0.0
    %1596 = vmatpush1.msra.mxu0 0.0
    %1597 = vmatprep.subr.mxu0 0.0
    %1598 = vmatpush1.msra.mxu0 0.0
    %1599 = vmatprep.subr.mxu0 0.0
    %1600 = vmatpush1.msra.mxu0 0.0
    %1601 = vmatprep.subr.mxu0 0.0
    %1602 = vmatpush1.msra.mxu0 0.0
    %1603 = vmatprep.subr.mxu0 0.0
    %1604 = vmatpush1.msra.mxu0 0.0
    %1605 = vmatprep.subr.mxu0 0.0
    %1606 = vmatpush1.msra.mxu0 0.0
    %1607 = vmatprep.subr.mxu0 0.0
    %1608 = vmatpush1.msra.mxu0 0.0
    %1609 = vmatprep.subr.mxu0 0.0
    %1610 = vmatpush1.msra.mxu0 0.0
    %1611 = vmatprep.subr.mxu0 0.0
    %1612 = vmatpush1.msra.mxu0 0.0
    %1613 = vmatprep.subr.mxu0 0.0
    %1614 = vmatpush1.msra.mxu0 0.0
    %1615 = vmatprep.subr.mxu0 0.0
    %1616 = vmatpush1.msra.mxu0 0.0
    %1617 = vmatprep.subr.mxu0 0.0
    %1618 = vmatpush1.msra.mxu0 0.0
    %1619 = vmatprep.subr.mxu0 0.0
    %1620 = vmatpush1.msra.mxu0 0.0
    %1621 = vmatprep.subr.mxu0 0.0
    %1622 = vmatpush1.msra.mxu0 0.0
    %1623 = vmatprep.subr.mxu0 0.0
    %1624 = vmatpush1.msra.mxu0 0.0
    %1625 = vmatprep.mubr.f32.mxu0 0.0
    %1626 = vmatmul.mubr.f32.gmra.mrb[0].mxu0 %v1550
    %v1627 = vpop.f32.mrb[0].mxu0
    %v1628 = vadd.f32 %v1438, %v1627
    %v1629 = vpop.f32.mrb[0].mxu0
    %v1630 = vadd.f32 %v1440, %v1629
    %1631 = vmatprep.mubr.f32.mxu0 0.0
    %1632 = vmatmul.mubr.f32.gmra.mrb[0].mxu0 %v1553
    %v1633 = vpop.f32.mrb[0].mxu0
    %v1634 = vadd.f32 %v1444, %v1633
    %v1635 = vpop.f32.mrb[0].mxu0
    %v1636 = vadd.f32 %v1446, %v1635
    %1637 = vmatprep.mubr.f32.mxu0 0.0
    %1638 = vmatmul.mubr.f32.gmra.mrb[0].mxu0 %v1556
    %v1639 = vpop.f32.mrb[0].mxu0
    %v1640 = vadd.f32 %v1450, %v1639
    %v1641 = vpop.f32.mrb[0].mxu0
    %v1642 = vadd.f32 %v1452, %v1641
    %1643 = vmatprep.mubr.f32.mxu0 0.0
    %1644 = vmatmul.mubr.f32.gmra.mrb[0].mxu0 %v1559
    %v1645 = vpop.f32.mrb[0].mxu0
    %v1646 = vadd.f32 %v1456, %v1645
    %v1647 = vpop.f32.mrb[0].mxu0
    %v1648 = vadd.f32 %v1458, %v1647
    %1649 = vdwg.mxu0
    %1650 = vmatprep.subr.mxu0 %v1338
    %1651 = vmatpush1.msra.mxu0 %v1337
    %1652 = vmatprep.subr.mxu0 %v1342
    %1653 = vmatpush1.msra.mxu0 %v1341
    %1654 = vmatprep.subr.mxu0 %v1346
    %1655 = vmatpush1.msra.mxu0 %v1345
    %1656 = vmatprep.subr.mxu0 %v1350
    %1657 = vmatpush1.msra.mxu0 %v1349
    %1658 = vmatprep.subr.mxu0 0.0
    %1659 = vmatpush1.msra.mxu0 0.0
    %1660 = vmatprep.subr.mxu0 0.0
    %1661 = vmatpush1.msra.mxu0 0.0
    %1662 = vmatprep.subr.mxu0 0.0
    %1663 = vmatpush1.msra.mxu0 0.0
    %1664 = vmatprep.subr.mxu0 0.0
    %1665 = vmatpush1.msra.mxu0 0.0
    %1666 = vmatprep.subr.mxu0 0.0
    %1667 = vmatpush1.msra.mxu0 0.0
    %1668 = vmatprep.subr.mxu0 0.0
    %1669 = vmatpush1.msra.mxu0 0.0
    %1670 = vmatprep.subr.mxu0 0.0
    %1671 = vmatpush1.msra.mxu0 0.0
    %1672 = vmatprep.subr.mxu0 0.0
    %1673 = vmatpush1.msra.mxu0 0.0
    %1674 = vmatprep.subr.mxu0 0.0
    %1675 = vmatpush1.msra.mxu0 0.0
    %1676 = vmatprep.subr.mxu0 0.0
    %1677 = vmatpush1.msra.mxu0 0.0
    %1678 = vmatprep.subr.mxu0 0.0
    %1679 = vmatpush1.msra.mxu0 0.0
    %1680 = vmatprep.subr.mxu0 0.0
    %1681 = vmatpush1.msra.mxu0 0.0
    %1682 = vmatprep.subr.mxu0 0.0
    %1683 = vmatpush1.msra.mxu0 0.0
    %1684 = vmatprep.subr.mxu0 0.0
    %1685 = vmatpush1.msra.mxu0 0.0
    %1686 = vmatprep.subr.mxu0 0.0
    %1687 = vmatpush1.msra.mxu0 0.0
    %1688 = vmatprep.subr.mxu0 0.0
    %1689 = vmatpush1.msra.mxu0 0.0
    %1690 = vmatprep.subr.mxu0 0.0
    %1691 = vmatpush1.msra.mxu0 0.0
    %1692 = vmatprep.subr.mxu0 0.0
    %1693 = vmatpush1.msra.mxu0 0.0
    %1694 = vmatprep.subr.mxu0 0.0
    %1695 = vmatpush1.msra.mxu0 0.0
    %1696 = vmatprep.subr.mxu0 0.0
    %1697 = vmatpush1.msra.mxu0 0.0
    %1698 = vmatprep.subr.mxu0 0.0
    %1699 = vmatpush1.msra.mxu0 0.0
    %1700 = vmatprep.subr.mxu0 0.0
    %1701 = vmatpush1.msra.mxu0 0.0
    %1702 = vmatprep.subr.mxu0 0.0
    %1703 = vmatpush1.msra.mxu0 0.0
    %1704 = vmatprep.subr.mxu0 0.0
    %1705 = vmatpush1.msra.mxu0 0.0
    %1706 = vmatprep.subr.mxu0 0.0
    %1707 = vmatpush1.msra.mxu0 0.0
    %1708 = vmatprep.subr.mxu0 0.0
    %1709 = vmatpush1.msra.mxu0 0.0
    %1710 = vmatprep.subr.mxu0 0.0
    %1711 = vmatpush1.msra.mxu0 0.0
    %1712 = vmatprep.subr.mxu0 0.0
    %1713 = vmatpush1.msra.mxu0 0.0
    %1714 = vmatprep.mubr.f32.mxu0 0.0
    %1715 = vmatmul.mubr.f32.gmra.mrb[0].mxu0 %v1550
    %v1716 = vpop.f32.mrb[0].mxu0
    %v1717 = vadd.f32 %v1527, %v1716
    %v1718 = vpop.f32.mrb[0].mxu0
    %v1719 = vadd.f32 %v1529, %v1718
    %1720 = vmatprep.mubr.f32.mxu0 0.0
    %1721 = vmatmul.mubr.f32.gmra.mrb[0].mxu0 %v1553
    %v1722 = vpop.f32.mrb[0].mxu0
    %v1723 = vadd.f32 %v1533, %v1722
    %v1724 = vpop.f32.mrb[0].mxu0
    %v1725 = vadd.f32 %v1535, %v1724
    %1726 = vmatprep.mubr.f32.mxu0 0.0
    %1727 = vmatmul.mubr.f32.gmra.mrb[0].mxu0 %v1556
    %v1728 = vpop.f32.mrb[0].mxu0
    %v1729 = vadd.f32 %v1539, %v1728
    %v1730 = vpop.f32.mrb[0].mxu0
    %v1731 = vadd.f32 %v1541, %v1730
    %1732 = vmatprep.mubr.f32.mxu0 0.0
    %1733 = vmatmul.mubr.f32.gmra.mrb[0].mxu0 %v1559
    %v1734 = vpop.f32.mrb[0].mxu0
    %v1735 = vadd.f32 %v1545, %v1734
    %v1736 = vpop.f32.mrb[0].mxu0
    %v1737 = vadd.f32 %v1547, %v1736
    %1738 = vdwg.mxu0
    %v1739 = vld [vmem:[%s7] sm:$0xff]
    %v1740 = vld [vmem:[%s7 + $0x8] sm:$0xff]
    %v1741 = vld [vmem:[%s7 + $0x10] sm:$0xff]
    %v1742 = vld [vmem:[%s7 + $0x18] sm:$0xff]
    %1744 = vset.pattern.permute.xlu0 0
    %1745 = vperm.xlu0 %1744, %v1739
    %v1746 = vpop.permute.xlu0 %1745
    %1749 = vset.pattern.permute.xlu0 0
    %1750 = vperm.xlu0 %1749, %v1740
    %v1751 = vpop.permute.xlu0 %1750
    %1754 = vset.pattern.permute.xlu0 0
    %1755 = vperm.xlu0 %1754, %v1741
    %v1756 = vpop.permute.xlu0 %1755
    %1759 = vset.pattern.permute.xlu0 0
    %1760 = vperm.xlu0 %1759, %v1742
    %v1761 = vpop.permute.xlu0 %1760
    %v1763 = vadd.f32 %v1628, %v1746
    %v1764 = vadd.f32 %v1630, %v1746
    %v1765 = vadd.f32 %v1717, %v1746
    %v1766 = vadd.f32 %v1719, %v1746
    %v1767 = vadd.f32 %v1634, %v1751
    %v1768 = vadd.f32 %v1636, %v1751
    %v1769 = vadd.f32 %v1723, %v1751
    %v1770 = vadd.f32 %v1725, %v1751
    %v1771 = vadd.f32 %v1640, %v1756
    %v1772 = vadd.f32 %v1642, %v1756
    %v1773 = vadd.f32 %v1729, %v1756
    %v1774 = vadd.f32 %v1731, %v1756
    %v1775 = vadd.f32 %v1646, %v1761
    %v1776 = vadd.f32 %v1648, %v1761
    %v1777 = vadd.f32 %v1735, %v1761
    %v1778 = vadd.f32 %v1737, %v1761
    %v1779 = vmax.f32 %v1763, 0.0
    %v1780 = vmax.f32 %v1764, 0.0
    %v1781 = vmax.f32 %v1765, 0.0
    %v1782 = vmax.f32 %v1766, 0.0
    %v1783 = vmax.f32 %v1767, 0.0
    %v1784 = vmax.f32 %v1768, 0.0
    %v1785 = vmax.f32 %v1769, 0.0
    %v1786 = vmax.f32 %v1770, 0.0
    %v1787 = vmax.f32 %v1771, 0.0
    %v1788 = vmax.f32 %v1772, 0.0
    %v1789 = vmax.f32 %v1773, 0.0
    %v1790 = vmax.f32 %v1774, 0.0
    %v1791 = vmax.f32 %v1775, 0.0
    %v1792 = vmax.f32 %v1776, 0.0
    %v1793 = vmax.f32 %v1777, 0.0
    %v1794 = vmax.f32 %v1778, 0.0
    %v1795 = vld [vmem:[%s8] sm:$0xff]
    %v1796 = vld [vmem:[%s8 + $0x8] sm:$0xff]
    %v1797 = vld [vmem:[%s8 + $0x10] sm:$0xff]
    %v1798 = vld [vmem:[%s8 + $0x18] sm:$0xff]
    %v1799 = vld [vmem:[%s9] sm:$0xff]
    %v1800 = vld [vmem:[%s9 + $0x8] sm:$0xff]
    %v1801 = vld [vmem:[%s9 + $0x10] sm:$0xff]
    %v1802 = vld [vmem:[%s9 + $0x18] sm:$0xff]
    %1804 = vset.pattern.permute.xlu0 0
    %1805 = vperm.xlu0 %1804, %v1799
    %v1806 = vpop.permute.xlu0 %1805
    %1809 = vset.pattern.permute.xlu0 0
    %1810 = vperm.xlu0 %1809, %v1800
    %v1811 = vpop.permute.xlu0 %1810
    %1814 = vset.pattern.permute.xlu0 0
    %1815 = vperm.xlu0 %1814, %v1801
    %v1816 = vpop.permute.xlu0 %1815
    %1819 = vset.pattern.permute.xlu0 0
    %1820 = vperm.xlu0 %1819, %v1802
    %v1821 = vpop.permute.xlu0 %1820
    %v1824 = vsel %vm1144, %v1795, 0
    %v1827 = vsel %vm1144, %v1796, 0
    %v1830 = vsel %vm1144, %v1797, 0
    %v1833 = vsel %vm1144, %v1798, 0
    %1835 = vmatprep.subr.mxu0 %v1780
    %1836 = vmatpush1.msra.mxu0 %v1779
    %1837 = vmatprep.subr.mxu0 %v1784
    %1838 = vmatpush1.msra.mxu0 %v1783
    %1839 = vmatprep.subr.mxu0 %v1788
    %1840 = vmatpush1.msra.mxu0 %v1787
    %1841 = vmatprep.subr.mxu0 %v1792
    %1842 = vmatpush1.msra.mxu0 %v1791
    %1843 = vmatprep.subr.mxu0 0.0
    %1844 = vmatpush1.msra.mxu0 0.0
    %1845 = vmatprep.subr.mxu0 0.0
    %1846 = vmatpush1.msra.mxu0 0.0
    %1847 = vmatprep.subr.mxu0 0.0
    %1848 = vmatpush1.msra.mxu0 0.0
    %1849 = vmatprep.subr.mxu0 0.0
    %1850 = vmatpush1.msra.mxu0 0.0
    %1851 = vmatprep.subr.mxu0 0.0
    %1852 = vmatpush1.msra.mxu0 0.0
    %1853 = vmatprep.subr.mxu0 0.0
    %1854 = vmatpush1.msra.mxu0 0.0
    %1855 = vmatprep.subr.mxu0 0.0
    %1856 = vmatpush1.msra.mxu0 0.0
    %1857 = vmatprep.subr.mxu0 0.0
    %1858 = vmatpush1.msra.mxu0 0.0
    %1859 = vmatprep.subr.mxu0 0.0
    %1860 = vmatpush1.msra.mxu0 0.0
    %1861 = vmatprep.subr.mxu0 0.0
    %1862 = vmatpush1.msra.mxu0 0.0
    %1863 = vmatprep.subr.mxu0 0.0
    %1864 = vmatpush1.msra.mxu0 0.0
    %1865 = vmatprep.subr.mxu0 0.0
    %1866 = vmatpush1.msra.mxu0 0.0
    %1867 = vmatprep.subr.mxu0 0.0
    %1868 = vmatpush1.msra.mxu0 0.0
    %1869 = vmatprep.subr.mxu0 0.0
    %1870 = vmatpush1.msra.mxu0 0.0
    %1871 = vmatprep.subr.mxu0 0.0
    %1872 = vmatpush1.msra.mxu0 0.0
    %1873 = vmatprep.subr.mxu0 0.0
    %1874 = vmatpush1.msra.mxu0 0.0
    %1875 = vmatprep.subr.mxu0 0.0
    %1876 = vmatpush1.msra.mxu0 0.0
    %1877 = vmatprep.subr.mxu0 0.0
    %1878 = vmatpush1.msra.mxu0 0.0
    %1879 = vmatprep.subr.mxu0 0.0
    %1880 = vmatpush1.msra.mxu0 0.0
    %1881 = vmatprep.subr.mxu0 0.0
    %1882 = vmatpush1.msra.mxu0 0.0
    %1883 = vmatprep.subr.mxu0 0.0
    %1884 = vmatpush1.msra.mxu0 0.0
    %1885 = vmatprep.subr.mxu0 0.0
    %1886 = vmatpush1.msra.mxu0 0.0
    %1887 = vmatprep.subr.mxu0 0.0
    %1888 = vmatpush1.msra.mxu0 0.0
    %1889 = vmatprep.subr.mxu0 0.0
    %1890 = vmatpush1.msra.mxu0 0.0
    %1891 = vmatprep.subr.mxu0 0.0
    %1892 = vmatpush1.msra.mxu0 0.0
    %1893 = vmatprep.subr.mxu0 0.0
    %1894 = vmatpush1.msra.mxu0 0.0
    %1895 = vmatprep.subr.mxu0 0.0
    %1896 = vmatpush1.msra.mxu0 0.0
    %1897 = vmatprep.subr.mxu0 0.0
    %1898 = vmatpush1.msra.mxu0 0.0
    %1899 = vmatprep.mubr.f32.mxu0 0.0
    %1900 = vmatmul.mubr.f32.gmra.mrb[0].mxu0 %v1824
    %v1901 = vpop.f32.mrb[0].mxu0
    %v1902 = vadd.f32 %v1806, %v1901
    %v1903 = vpop.f32.mrb[0].mxu0
    %v1904 = vadd.f32 %v1806, %v1903
    %1905 = vmatprep.mubr.f32.mxu0 0.0
    %1906 = vmatmul.mubr.f32.gmra.mrb[0].mxu0 %v1827
    %v1907 = vpop.f32.mrb[0].mxu0
    %v1908 = vadd.f32 %v1811, %v1907
    %v1909 = vpop.f32.mrb[0].mxu0
    %v1910 = vadd.f32 %v1811, %v1909
    %1911 = vmatprep.mubr.f32.mxu0 0.0
    %1912 = vmatmul.mubr.f32.gmra.mrb[0].mxu0 %v1830
    %v1913 = vpop.f32.mrb[0].mxu0
    %v1914 = vadd.f32 %v1816, %v1913
    %v1915 = vpop.f32.mrb[0].mxu0
    %v1916 = vadd.f32 %v1816, %v1915
    %1917 = vmatprep.mubr.f32.mxu0 0.0
    %1918 = vmatmul.mubr.f32.gmra.mrb[0].mxu0 %v1833
    %v1919 = vpop.f32.mrb[0].mxu0
    %v1920 = vadd.f32 %v1821, %v1919
    %v1921 = vpop.f32.mrb[0].mxu0
    %v1922 = vadd.f32 %v1821, %v1921
    %1923 = vdwg.mxu0
    %1924 = vmatprep.subr.mxu0 %v1782
    %1925 = vmatpush1.msra.mxu0 %v1781
    %1926 = vmatprep.subr.mxu0 %v1786
    %1927 = vmatpush1.msra.mxu0 %v1785
    %1928 = vmatprep.subr.mxu0 %v1790
    %1929 = vmatpush1.msra.mxu0 %v1789
    %1930 = vmatprep.subr.mxu0 %v1794
    %1931 = vmatpush1.msra.mxu0 %v1793
    %1932 = vmatprep.subr.mxu0 0.0
    %1933 = vmatpush1.msra.mxu0 0.0
    %1934 = vmatprep.subr.mxu0 0.0
    %1935 = vmatpush1.msra.mxu0 0.0
    %1936 = vmatprep.subr.mxu0 0.0
    %1937 = vmatpush1.msra.mxu0 0.0
    %1938 = vmatprep.subr.mxu0 0.0
    %1939 = vmatpush1.msra.mxu0 0.0
    %1940 = vmatprep.subr.mxu0 0.0
    %1941 = vmatpush1.msra.mxu0 0.0
    %1942 = vmatprep.subr.mxu0 0.0
    %1943 = vmatpush1.msra.mxu0 0.0
    %1944 = vmatprep.subr.mxu0 0.0
    %1945 = vmatpush1.msra.mxu0 0.0
    %1946 = vmatprep.subr.mxu0 0.0
    %1947 = vmatpush1.msra.mxu0 0.0
    %1948 = vmatprep.subr.mxu0 0.0
    %1949 = vmatpush1.msra.mxu0 0.0
    %1950 = vmatprep.subr.mxu0 0.0
    %1951 = vmatpush1.msra.mxu0 0.0
    %1952 = vmatprep.subr.mxu0 0.0
    %1953 = vmatpush1.msra.mxu0 0.0
    %1954 = vmatprep.subr.mxu0 0.0
    %1955 = vmatpush1.msra.mxu0 0.0
    %1956 = vmatprep.subr.mxu0 0.0
    %1957 = vmatpush1.msra.mxu0 0.0
    %1958 = vmatprep.subr.mxu0 0.0
    %1959 = vmatpush1.msra.mxu0 0.0
    %1960 = vmatprep.subr.mxu0 0.0
    %1961 = vmatpush1.msra.mxu0 0.0
    %1962 = vmatprep.subr.mxu0 0.0
    %1963 = vmatpush1.msra.mxu0 0.0
    %1964 = vmatprep.subr.mxu0 0.0
    %1965 = vmatpush1.msra.mxu0 0.0
    %1966 = vmatprep.subr.mxu0 0.0
    %1967 = vmatpush1.msra.mxu0 0.0
    %1968 = vmatprep.subr.mxu0 0.0
    %1969 = vmatpush1.msra.mxu0 0.0
    %1970 = vmatprep.subr.mxu0 0.0
    %1971 = vmatpush1.msra.mxu0 0.0
    %1972 = vmatprep.subr.mxu0 0.0
    %1973 = vmatpush1.msra.mxu0 0.0
    %1974 = vmatprep.subr.mxu0 0.0
    %1975 = vmatpush1.msra.mxu0 0.0
    %1976 = vmatprep.subr.mxu0 0.0
    %1977 = vmatpush1.msra.mxu0 0.0
    %1978 = vmatprep.subr.mxu0 0.0
    %1979 = vmatpush1.msra.mxu0 0.0
    %1980 = vmatprep.subr.mxu0 0.0
    %1981 = vmatpush1.msra.mxu0 0.0
    %1982 = vmatprep.subr.mxu0 0.0
    %1983 = vmatpush1.msra.mxu0 0.0
    %1984 = vmatprep.subr.mxu0 0.0
    %1985 = vmatpush1.msra.mxu0 0.0
    %1986 = vmatprep.subr.mxu0 0.0
    %1987 = vmatpush1.msra.mxu0 0.0
    %1988 = vmatprep.mubr.f32.mxu0 0.0
    %1989 = vmatmul.mubr.f32.gmra.mrb[0].mxu0 %v1824
    %v1990 = vpop.f32.mrb[0].mxu0
    %v1991 = vadd.f32 %v1806, %v1990
    %v1992 = vpop.f32.mrb[0].mxu0
    %v1993 = vadd.f32 %v1806, %v1992
    %1994 = vmatprep.mubr.f32.mxu0 0.0
    %1995 = vmatmul.mubr.f32.gmra.mrb[0].mxu0 %v1827
    %v1996 = vpop.f32.mrb[0].mxu0
    %v1997 = vadd.f32 %v1811, %v1996
    %v1998 = vpop.f32.mrb[0].mxu0
    %v1999 = vadd.f32 %v1811, %v1998
    %2000 = vmatprep.mubr.f32.mxu0 0.0
    %2001 = vmatmul.mubr.f32.gmra.mrb[0].mxu0 %v1830
    %v2002 = vpop.f32.mrb[0].mxu0
    %v2003 = vadd.f32 %v1816, %v2002
    %v2004 = vpop.f32.mrb[0].mxu0
    %v2005 = vadd.f32 %v1816, %v2004
    %2006 = vmatprep.mubr.f32.mxu0 0.0
    %2007 = vmatmul.mubr.f32.gmra.mrb[0].mxu0 %v1833
    %v2008 = vpop.f32.mrb[0].mxu0
    %v2009 = vadd.f32 %v1821, %v2008
    %v2010 = vpop.f32.mrb[0].mxu0
    %v2011 = vadd.f32 %v1821, %v2010
    %2012 = vdwg.mxu0
    %v2013 = vmax.f32 %v1902, 0.0
    %v2014 = vmax.f32 %v1904, 0.0
    %v2015 = vmax.f32 %v1991, 0.0
    %v2016 = vmax.f32 %v1993, 0.0
    %v2017 = vmax.f32 %v1908, 0.0
    %v2018 = vmax.f32 %v1910, 0.0
    %v2019 = vmax.f32 %v1997, 0.0
    %v2020 = vmax.f32 %v1999, 0.0
    %v2021 = vmax.f32 %v1914, 0.0
    %v2022 = vmax.f32 %v1916, 0.0
    %v2023 = vmax.f32 %v2003, 0.0
    %v2024 = vmax.f32 %v2005, 0.0
    %v2025 = vmax.f32 %v1920, 0.0
    %v2026 = vmax.f32 %v1922, 0.0
    %v2027 = vmax.f32 %v2009, 0.0
    %v2028 = vmax.f32 %v2011, 0.0
    %v2029 = vld [vmem:[%s10] sm:$0xff]
    %v2030 = vld [vmem:[%s11] sm:$0xff]
    %2032 = vset.pattern.permute.xlu0 0
    %2033 = vperm.xlu0 %2032, %v2030
    %v2034 = vpop.permute.xlu0 %2033
    %v2037 = vsel %vm1144, %v2029, 0
    %2039 = vmatprep.subr.mxu0 %v2014
    %2040 = vmatpush1.msra.mxu0 %v2013
    %2041 = vmatprep.subr.mxu0 %v2018
    %2042 = vmatpush1.msra.mxu0 %v2017
    %2043 = vmatprep.subr.mxu0 %v2022
    %2044 = vmatpush1.msra.mxu0 %v2021
    %2045 = vmatprep.subr.mxu0 %v2026
    %2046 = vmatpush1.msra.mxu0 %v2025
    %2047 = vmatprep.subr.mxu0 0.0
    %2048 = vmatpush1.msra.mxu0 0.0
    %2049 = vmatprep.subr.mxu0 0.0
    %2050 = vmatpush1.msra.mxu0 0.0
    %2051 = vmatprep.subr.mxu0 0.0
    %2052 = vmatpush1.msra.mxu0 0.0
    %2053 = vmatprep.subr.mxu0 0.0
    %2054 = vmatpush1.msra.mxu0 0.0
    %2055 = vmatprep.subr.mxu0 0.0
    %2056 = vmatpush1.msra.mxu0 0.0
    %2057 = vmatprep.subr.mxu0 0.0
    %2058 = vmatpush1.msra.mxu0 0.0
    %2059 = vmatprep.subr.mxu0 0.0
    %2060 = vmatpush1.msra.mxu0 0.0
    %2061 = vmatprep.subr.mxu0 0.0
    %2062 = vmatpush1.msra.mxu0 0.0
    %2063 = vmatprep.subr.mxu0 0.0
    %2064 = vmatpush1.msra.mxu0 0.0
    %2065 = vmatprep.subr.mxu0 0.0
    %2066 = vmatpush1.msra.mxu0 0.0
    %2067 = vmatprep.subr.mxu0 0.0
    %2068 = vmatpush1.msra.mxu0 0.0
    %2069 = vmatprep.subr.mxu0 0.0
    %2070 = vmatpush1.msra.mxu0 0.0
    %2071 = vmatprep.subr.mxu0 0.0
    %2072 = vmatpush1.msra.mxu0 0.0
    %2073 = vmatprep.subr.mxu0 0.0
    %2074 = vmatpush1.msra.mxu0 0.0
    %2075 = vmatprep.subr.mxu0 0.0
    %2076 = vmatpush1.msra.mxu0 0.0
    %2077 = vmatprep.subr.mxu0 0.0
    %2078 = vmatpush1.msra.mxu0 0.0
    %2079 = vmatprep.subr.mxu0 0.0
    %2080 = vmatpush1.msra.mxu0 0.0
    %2081 = vmatprep.subr.mxu0 0.0
    %2082 = vmatpush1.msra.mxu0 0.0
    %2083 = vmatprep.subr.mxu0 0.0
    %2084 = vmatpush1.msra.mxu0 0.0
    %2085 = vmatprep.subr.mxu0 0.0
    %2086 = vmatpush1.msra.mxu0 0.0
    %2087 = vmatprep.subr.mxu0 0.0
    %2088 = vmatpush1.msra.mxu0 0.0
    %2089 = vmatprep.subr.mxu0 0.0
    %2090 = vmatpush1.msra.mxu0 0.0
    %2091 = vmatprep.subr.mxu0 0.0
    %2092 = vmatpush1.msra.mxu0 0.0
    %2093 = vmatprep.subr.mxu0 0.0
    %2094 = vmatpush1.msra.mxu0 0.0
    %2095 = vmatprep.subr.mxu0 0.0
    %2096 = vmatpush1.msra.mxu0 0.0
    %2097 = vmatprep.subr.mxu0 0.0
    %2098 = vmatpush1.msra.mxu0 0.0
    %2099 = vmatprep.subr.mxu0 0.0
    %2100 = vmatpush1.msra.mxu0 0.0
    %2101 = vmatprep.subr.mxu0 0.0
    %2102 = vmatpush1.msra.mxu0 0.0
    %2103 = vmatprep.mubr.f32.mxu0 0.0
    %2104 = vmatmul.mubr.f32.gmra.mrb[0].mxu0 %v2037
    %v2105 = vpop.f32.mrb[0].mxu0
    %v2106 = vadd.f32 %v2034, %v2105
    %v2107 = vpop.f32.mrb[0].mxu0
    %v2108 = vadd.f32 %v2034, %v2107
    %2109 = vdwg.mxu0
    %2110 = vmatprep.subr.mxu0 %v2016
    %2111 = vmatpush1.msra.mxu0 %v2015
    %2112 = vmatprep.subr.mxu0 %v2020
    %2113 = vmatpush1.msra.mxu0 %v2019
    %2114 = vmatprep.subr.mxu0 %v2024
    %2115 = vmatpush1.msra.mxu0 %v2023
    %2116 = vmatprep.subr.mxu0 %v2028
    %2117 = vmatpush1.msra.mxu0 %v2027
    %2118 = vmatprep.subr.mxu0 0.0
    %2119 = vmatpush1.msra.mxu0 0.0
    %2120 = vmatprep.subr.mxu0 0.0
    %2121 = vmatpush1.msra.mxu0 0.0
    %2122 = vmatprep.subr.mxu0 0.0
    %2123 = vmatpush1.msra.mxu0 0.0
    %2124 = vmatprep.subr.mxu0 0.0
    %2125 = vmatpush1.msra.mxu0 0.0
    %2126 = vmatprep.subr.mxu0 0.0
    %2127 = vmatpush1.msra.mxu0 0.0
    %2128 = vmatprep.subr.mxu0 0.0
    %2129 = vmatpush1.msra.mxu0 0.0
    %2130 = vmatprep.subr.mxu0 0.0
    %2131 = vmatpush1.msra.mxu0 0.0
    %2132 = vmatprep.subr.mxu0 0.0
    %2133 = vmatpush1.msra.mxu0 0.0
    %2134 = vmatprep.subr.mxu0 0.0
    %2135 = vmatpush1.msra.mxu0 0.0
    %2136 = vmatprep.subr.mxu0 0.0
    %2137 = vmatpush1.msra.mxu0 0.0
    %2138 = vmatprep.subr.mxu0 0.0
    %2139 = vmatpush1.msra.mxu0 0.0
    %2140 = vmatprep.subr.mxu0 0.0
    %2141 = vmatpush1.msra.mxu0 0.0
    %2142 = vmatprep.subr.mxu0 0.0
    %2143 = vmatpush1.msra.mxu0 0.0
    %2144 = vmatprep.subr.mxu0 0.0
    %2145 = vmatpush1.msra.mxu0 0.0
    %2146 = vmatprep.subr.mxu0 0.0
    %2147 = vmatpush1.msra.mxu0 0.0
    %2148 = vmatprep.subr.mxu0 0.0
    %2149 = vmatpush1.msra.mxu0 0.0
    %2150 = vmatprep.subr.mxu0 0.0
    %2151 = vmatpush1.msra.mxu0 0.0
    %2152 = vmatprep.subr.mxu0 0.0
    %2153 = vmatpush1.msra.mxu0 0.0
    %2154 = vmatprep.subr.mxu0 0.0
    %2155 = vmatpush1.msra.mxu0 0.0
    %2156 = vmatprep.subr.mxu0 0.0
    %2157 = vmatpush1.msra.mxu0 0.0
    %2158 = vmatprep.subr.mxu0 0.0
    %2159 = vmatpush1.msra.mxu0 0.0
    %2160 = vmatprep.subr.mxu0 0.0
    %2161 = vmatpush1.msra.mxu0 0.0
    %2162 = vmatprep.subr.mxu0 0.0
    %2163 = vmatpush1.msra.mxu0 0.0
    %2164 = vmatprep.subr.mxu0 0.0
    %2165 = vmatpush1.msra.mxu0 0.0
    %2166 = vmatprep.subr.mxu0 0.0
    %2167 = vmatpush1.msra.mxu0 0.0
    %2168 = vmatprep.subr.mxu0 0.0
    %2169 = vmatpush1.msra.mxu0 0.0
    %2170 = vmatprep.subr.mxu0 0.0
    %2171 = vmatpush1.msra.mxu0 0.0
    %2172 = vmatprep.subr.mxu0 0.0
    %2173 = vmatpush1.msra.mxu0 0.0
    %2174 = vmatprep.mubr.f32.mxu0 0.0
    %2175 = vmatmul.mubr.f32.gmra.mrb[0].mxu0 %v2037
    %v2176 = vpop.f32.mrb[0].mxu0
    %v2177 = vadd.f32 %v2034, %v2176
    %v2178 = vpop.f32.mrb[0].mxu0
    %v2179 = vadd.f32 %v2034, %v2178
    %2180 = vdwg.mxu0
    %2181 = vst [vmem:[#allocation2] sm:$0xff] %v2106
    %2182 = vst [vmem:[#allocation2 + $0x8] sm:$0xff] %v2108
    %2183 = vst [vmem:[#allocation2 + $0x10] sm:$0xff] %v2177
    %2184 = vst [vmem:[#allocation2 + $0x18] sm:$0xff] %v2179
    // Predicated region
    $region50: #{tpu_custom_call.1} parent=1 // pred_check
      _
    $region51: #{tpu_custom_call.1} parent=1 // pred_check_branch
      %2186 = sbr.rel (0) target = $region53
    $region52: #{tpu_custom_call.1} parent=1 // pred_region
      %s2188 = ssub.s32 512, 512
      %2189 = vsyncadd [#allocation3], %s2188
      %s2191 = sshll.u32 [#allocation2], 4
      %s2192 = int_to_ptr.vmem [resolvable:$true] %s2191
      %2194 = dma.vmem_to_hbm [thread:$0]  %s2192, 512, %s12, [#allocation3]
    $region53: #{tpu_custom_call.1} parent=1 // pred_fallthru
      _
    // Predicated region
    $region54: #{tpu_custom_call.1} parent=1 // pred_check
      _
    $region55: #{tpu_custom_call.1} parent=1 // pred_check_branch
      %2196 = sbr.rel (0) target = $region57
    $region56: #{tpu_custom_call.1} parent=1 // pred_region
      %2197 = dma.done [#allocation3], 512
    $region57: #{tpu_custom_call.1} parent=1 // pred_fallthru
      _
    %2198 = vsyncpa [#allocation3], 1

</llo_original>
